<compile_context>
chip_gen: v7x
topology: tpu7x:2x2x1
jax: 0.10.0
libtpu: 0.0.40
codegen_flags: <defaults>
</compile_context>

<pallas_src>
import functools

import jax
import jax.numpy as jnp
from jax.experimental import pallas as pl
from jax.experimental.pallas import tpu as pltpu

BN_EPS = 1e-5


def _global_graph_kernel(*refs, depth, n_batch, seq_len):
    # refs = (p_ref, [wq, gq, bq, wk, gk, bk, wv, gv, bv] * depth, o_ref)
    p_ref = refs[0]
    o_ref = refs[-1]
    lp = refs[1:-1]

    rows = n_batch * seq_len
    inv_rows = 1.0 / float(rows)

    # Fused input glue: NCL (N, C, L) -> channels-last (N*L, C).
    x = jnp.swapaxes(p_ref[...], 1, 2).reshape(rows, -1).astype(jnp.float32)

    for d in range(depth):
        wq, gq, bq, wk, gk, bk, wv, gv, bv = lp[9 * d: 9 * d + 9]
        width = wq.shape[1]

        xb = x.astype(jnp.bfloat16)   # bf16 MXU operands, f32 accumulation

        def proj_bn_relu(w_ref, g_ref, beta_ref):
            # Linear (bias folded away: training-mode BatchNorm's mean
            # subtraction cancels a per-channel constant bias exactly).
            y = jnp.dot(xb, w_ref[...], preferred_element_type=jnp.float32)
            # BatchNorm1d (training mode: biased batch stats over N*L), with a
            # centered two-pass variance for numerical robustness, then ReLU.
            mean = jnp.sum(y, axis=0, keepdims=True) * inv_rows
            yc = y - mean
            var = jnp.sum(yc * yc, axis=0, keepdims=True) * inv_rows
            scale = g_ref[...] * jax.lax.rsqrt(var + BN_EPS)
            return jnp.maximum(yc * scale + beta_ref[...], 0.0)  # (rows, W) f32

        pq = proj_bn_relu(wq, gq, bq).reshape(n_batch, seq_len, width)  # (N,L,W)
        pk = proj_bn_relu(wk, gk, bk).reshape(n_batch, seq_len, width)
        pv = proj_bn_relu(wv, gv, bv).reshape(n_batch, seq_len, width)

        # weight[n,i,j] = sum_l PQ[n,i,l] * PK[n,j,l]  == bmm(PQ, PK^T) in NCL.
        # Single batched contraction; PQ is put in NCL form so the dot is the
        # canonical batched-matmul layout (contract last-of-lhs / 2nd-last-rhs).
        pq_ncl = jnp.swapaxes(pq, 1, 2)                        # (N, W, L)
        att = jnp.einsum('nil,nlj->nij',
                         pq_ncl.astype(jnp.bfloat16), pk.astype(jnp.bfloat16),
                         preferred_element_type=jnp.float32)   # (N, W, W) f32

        # nn.Softmax() implicit dim on a 3-D tensor -> softmax over the batch
        # axis (dim 0).  Exact reciprocal (EUP) for parity with torch division.
        m = jnp.max(att, axis=0, keepdims=True)
        e = jnp.exp(att - m)
        den = jnp.sum(e, axis=0, keepdims=True)
        sw = e * pl.reciprocal(den)                            # (N, W, W) f32

        # out_cl[n,l,i] = sum_j PV_cl[n,l,j] * sw[n,i,j]  == bmm(softmax, PV),
        # expressed in the MXU-native transpose-RHS form (contract last dims).
        out = jnp.einsum('nlj,nij->nli',
                         pv.astype(jnp.bfloat16), sw.astype(jnp.bfloat16),
                         preferred_element_type=jnp.float32)   # (N, L, W) f32
        x = out.reshape(rows, width)

    # Fused output glue: channels-last (N, L, W) -> NCL (N, W, L), one store.
    # (Last dim = L < 128 -> masked vst; acceptable at these tiny sizes.)
    o_ref[...] = jnp.swapaxes(
        x.reshape(n_batch, seq_len, -1), 1, 2).astype(o_ref.dtype)


def global_graph_forward(p_matrix, params):
    """p_matrix: (N, C, L) in PyTorch NCL layout. Returns (N, width, L)."""
    n_batch, c_in, seq_len = p_matrix.shape
    depth = len(params)
    width = params[0]['wq'].shape[1]
    rows = n_batch * seq_len

    args = [p_matrix]
    for layer in params:
        args += [layer['wq'], layer['gq'], layer['bq'],
                 layer['wk'], layer['gk'], layer['bk'],
                 layer['wv'], layer['gv'], layer['bv']]

    kernel = functools.partial(_global_graph_kernel, depth=depth,
                               n_batch=n_batch, seq_len=seq_len)
    vmem_spec = pl.BlockSpec(memory_space=pltpu.MemorySpace.VMEM)

    # Advisory cost estimate so XLA can schedule around this latency-bound call.
    flops = 0
    transcendentals = 0
    cin = c_in
    for _ in range(depth):
        flops += 3 * 2 * rows * cin * width                    # Q/K/V projections
        flops += 2 * 2 * n_batch * width * width * seq_len     # QK^T + attn @ V
        transcendentals += n_batch * width * width + width * width + 3 * width
        cin = width
    in_bytes = int(p_matrix.size) * p_matrix.dtype.itemsize
    param_bytes = sum(int(a.size) * a.dtype.itemsize for a in args[1:])
    out_bytes = n_batch * width * seq_len * 4
    cost = pl.CostEstimate(flops=int(flops),
                           transcendentals=int(transcendentals),
                           bytes_accessed=int(in_bytes + param_bytes + out_bytes))

    # Explicit VMEM budget: resident I/O + weights + per-layer working set,
    # with 2x headroom, clamped to [4 MiB, 64 MiB] (v7x physical VMEM per TC).
    work_bytes = rows * (max(c_in, width) + 6 * width) * 4 \
        + 6 * n_batch * width * width * 4
    vmem_limit = int(min(max(2 * (in_bytes + param_bytes + out_bytes + work_bytes),
                             4 << 20), 64 << 20))

    return pl.pallas_call(
        kernel,
        out_shape=jax.ShapeDtypeStruct((n_batch, width, seq_len), jnp.float32),
        in_specs=[vmem_spec] * len(args),
        out_specs=vmem_spec,
        compiler_params=pltpu.CompilerParams(vmem_limit_bytes=vmem_limit),
        cost_estimate=cost,
    )(*args)


def init_global_graph_params(key, depth, width, width_sub):
    """Deterministic synthetic parameters (not a checkpoint load).

    Per layer / per head (q, k, v):
      w    : (C_in, width) bf16 -- nn.Linear weight, stored transposed (in,out)
                                   and in bf16 (matmuls accumulate in f32).
      g, b : (1, width)    f32  -- BatchNorm1d gamma / beta.
    The nn.Linear bias is omitted on purpose: training-mode BatchNorm subtracts
    the per-channel batch mean, which cancels a constant bias exactly.
    """
    params = []
    c_in = 2 * width_sub
    for _ in range(depth):
        layer = {}
        for name in ('q', 'k', 'v'):
            key, k1, k2, k3 = jax.random.split(key, 4)
            layer['w' + name] = (0.1 * jax.random.normal(
                k1, (c_in, width), jnp.float32)).astype(jnp.bfloat16)
            layer['g' + name] = 1.0 + 0.1 * jax.random.normal(
                k2, (1, width), jnp.float32)
            layer['b' + name] = 0.1 * jax.random.normal(
                k3, (1, width), jnp.float32)
        params.append(layer)
        c_in = width
    return params


if __name__ == "__main__":
    depth, width, width_sub = 2, 32, 16
    n_batch, seq_len = 2, 8
    in_channels = 2 * width_sub

    key = jax.random.PRNGKey(0)
    key, pkey = jax.random.split(key)
    p_matrix = jax.random.normal(
        pkey, (n_batch, in_channels, seq_len), jnp.float32)
    params = init_global_graph_params(key, depth, width, width_sub)

    out = global_graph_forward(p_matrix, params)
    out = jax.block_until_ready(out)
    assert out.shape == (n_batch, width, seq_len)
    assert jnp.all(jnp.isfinite(out))
    print("KERNEL_OK")
</pallas_src>

<mosaic_0001>
module attributes {stable_mosaic.version = 11 : i64} {
  func.func @_global_graph_kernel(%arg0: memref<2x32x8xf32, #tpu.memory_space<vmem>>, %arg1: memref<32x32xbf16, #tpu.memory_space<vmem>>, %arg2: memref<1x32xf32, #tpu.memory_space<vmem>>, %arg3: memref<1x32xf32, #tpu.memory_space<vmem>>, %arg4: memref<32x32xbf16, #tpu.memory_space<vmem>>, %arg5: memref<1x32xf32, #tpu.memory_space<vmem>>, %arg6: memref<1x32xf32, #tpu.memory_space<vmem>>, %arg7: memref<32x32xbf16, #tpu.memory_space<vmem>>, %arg8: memref<1x32xf32, #tpu.memory_space<vmem>>, %arg9: memref<1x32xf32, #tpu.memory_space<vmem>>, %arg10: memref<32x32xbf16, #tpu.memory_space<vmem>>, %arg11: memref<1x32xf32, #tpu.memory_space<vmem>>, %arg12: memref<1x32xf32, #tpu.memory_space<vmem>>, %arg13: memref<32x32xbf16, #tpu.memory_space<vmem>>, %arg14: memref<1x32xf32, #tpu.memory_space<vmem>>, %arg15: memref<1x32xf32, #tpu.memory_space<vmem>>, %arg16: memref<32x32xbf16, #tpu.memory_space<vmem>>, %arg17: memref<1x32xf32, #tpu.memory_space<vmem>>, %arg18: memref<1x32xf32, #tpu.memory_space<vmem>>, %arg19: memref<2x32x8xf32, #tpu.memory_space<vmem>>) attributes {dimension_semantics = [], scalar_prefetch = 0 : i64, scratch_operands = 0 : i64, tpu.core_type = #tpu.core_type<tc>} {
    %c0 = arith.constant 0 : index
    %c0_0 = arith.constant 0 : index
    %c0_1 = arith.constant 0 : index
    %0 = vector.load %arg0[%c0, %c0_0, %c0_1] : memref<2x32x8xf32, #tpu.memory_space<vmem>>, vector<2x32x8xf32>
    %1 = tpu.transpose %0, [0, 2, 1] : vector<2x32x8xf32> -> vector<2x8x32xf32>
    %2 = vector.shape_cast %1 : vector<2x8x32xf32> to vector<16x32xf32>
    %3 = arith.truncf %2 : vector<16x32xf32> to vector<16x32xbf16>
    %c0_2 = arith.constant 0 : index
    %c0_3 = arith.constant 0 : index
    %4 = vector.load %arg1[%c0_2, %c0_3] : memref<32x32xbf16, #tpu.memory_space<vmem>>, vector<32x32xbf16>
    %cst = arith.constant dense<0.000000e+00> : vector<16x32xf32>
    %5 = tpu.matmul %3, %4, %cst {dimension_numbers = #tpu.dot_dimension_numbers<[1], [0], [0], [1], [0, 0, 1, 1], [], []>} : vector<16x32xbf16>, vector<32x32xbf16>, vector<16x32xf32> -> vector<16x32xf32>
    %cst_4 = arith.constant dense<0.000000e+00> : vector<32xf32>
    %6 = vector.multi_reduction <add>, %5, %cst_4 [0] : vector<16x32xf32> to vector<32xf32>
    %7 = vector.shape_cast %6 : vector<32xf32> to vector<1x32xf32>
    %cst_5 = arith.constant 6.250000e-02 : f32
    %8 = vector.broadcast %cst_5 : f32 to vector<1x32xf32>
    %9 = arith.mulf %7, %8 : vector<1x32xf32>
    %10 = vector.broadcast %9 : vector<1x32xf32> to vector<16x32xf32>
    %11 = arith.subf %5, %10 : vector<16x32xf32>
    %12 = arith.mulf %11, %11 : vector<16x32xf32>
    %cst_6 = arith.constant dense<0.000000e+00> : vector<32xf32>
    %13 = vector.multi_reduction <add>, %12, %cst_6 [0] : vector<16x32xf32> to vector<32xf32>
    %14 = vector.shape_cast %13 : vector<32xf32> to vector<1x32xf32>
    %cst_7 = arith.constant 6.250000e-02 : f32
    %15 = vector.broadcast %cst_7 : f32 to vector<1x32xf32>
    %16 = arith.mulf %14, %15 : vector<1x32xf32>
    %c0_8 = arith.constant 0 : index
    %c0_9 = arith.constant 0 : index
    %17 = vector.load %arg2[%c0_8, %c0_9] : memref<1x32xf32, #tpu.memory_space<vmem>>, vector<1x32xf32>
    %cst_10 = arith.constant 9.99999974E-6 : f32
    %18 = vector.broadcast %cst_10 : f32 to vector<1x32xf32>
    %19 = arith.addf %16, %18 : vector<1x32xf32>
    %20 = math.rsqrt %19 : vector<1x32xf32>
    %21 = arith.mulf %17, %20 : vector<1x32xf32>
    %22 = vector.broadcast %21 : vector<1x32xf32> to vector<16x32xf32>
    %23 = arith.mulf %11, %22 : vector<16x32xf32>
    %c0_11 = arith.constant 0 : index
    %c0_12 = arith.constant 0 : index
    %24 = vector.load %arg3[%c0_11, %c0_12] : memref<1x32xf32, #tpu.memory_space<vmem>>, vector<1x32xf32>
    %25 = vector.broadcast %24 : vector<1x32xf32> to vector<16x32xf32>
    %26 = arith.addf %23, %25 : vector<16x32xf32>
    %cst_13 = arith.constant 0.000000e+00 : f32
    %27 = vector.broadcast %cst_13 : f32 to vector<16x32xf32>
    %28 = arith.maximumf %26, %27 : vector<16x32xf32>
    %29 = vector.shape_cast %28 : vector<16x32xf32> to vector<2x8x32xf32>
    %c0_14 = arith.constant 0 : index
    %c0_15 = arith.constant 0 : index
    %30 = vector.load %arg4[%c0_14, %c0_15] : memref<32x32xbf16, #tpu.memory_space<vmem>>, vector<32x32xbf16>
    %cst_16 = arith.constant dense<0.000000e+00> : vector<16x32xf32>
    %31 = tpu.matmul %3, %30, %cst_16 {dimension_numbers = #tpu.dot_dimension_numbers<[1], [0], [0], [1], [0, 0, 1, 1], [], []>} : vector<16x32xbf16>, vector<32x32xbf16>, vector<16x32xf32> -> vector<16x32xf32>
    %cst_17 = arith.constant dense<0.000000e+00> : vector<32xf32>
    %32 = vector.multi_reduction <add>, %31, %cst_17 [0] : vector<16x32xf32> to vector<32xf32>
    %33 = vector.shape_cast %32 : vector<32xf32> to vector<1x32xf32>
    %cst_18 = arith.constant 6.250000e-02 : f32
    %34 = vector.broadcast %cst_18 : f32 to vector<1x32xf32>
    %35 = arith.mulf %33, %34 : vector<1x32xf32>
    %36 = vector.broadcast %35 : vector<1x32xf32> to vector<16x32xf32>
    %37 = arith.subf %31, %36 : vector<16x32xf32>
    %38 = arith.mulf %37, %37 : vector<16x32xf32>
    %cst_19 = arith.constant dense<0.000000e+00> : vector<32xf32>
    %39 = vector.multi_reduction <add>, %38, %cst_19 [0] : vector<16x32xf32> to vector<32xf32>
    %40 = vector.shape_cast %39 : vector<32xf32> to vector<1x32xf32>
    %cst_20 = arith.constant 6.250000e-02 : f32
    %41 = vector.broadcast %cst_20 : f32 to vector<1x32xf32>
    %42 = arith.mulf %40, %41 : vector<1x32xf32>
    %c0_21 = arith.constant 0 : index
    %c0_22 = arith.constant 0 : index
    %43 = vector.load %arg5[%c0_21, %c0_22] : memref<1x32xf32, #tpu.memory_space<vmem>>, vector<1x32xf32>
    %cst_23 = arith.constant 9.99999974E-6 : f32
    %44 = vector.broadcast %cst_23 : f32 to vector<1x32xf32>
    %45 = arith.addf %42, %44 : vector<1x32xf32>
    %46 = math.rsqrt %45 : vector<1x32xf32>
    %47 = arith.mulf %43, %46 : vector<1x32xf32>
    %48 = vector.broadcast %47 : vector<1x32xf32> to vector<16x32xf32>
    %49 = arith.mulf %37, %48 : vector<16x32xf32>
    %c0_24 = arith.constant 0 : index
    %c0_25 = arith.constant 0 : index
    %50 = vector.load %arg6[%c0_24, %c0_25] : memref<1x32xf32, #tpu.memory_space<vmem>>, vector<1x32xf32>
    %51 = vector.broadcast %50 : vector<1x32xf32> to vector<16x32xf32>
    %52 = arith.addf %49, %51 : vector<16x32xf32>
    %cst_26 = arith.constant 0.000000e+00 : f32
    %53 = vector.broadcast %cst_26 : f32 to vector<16x32xf32>
    %54 = arith.maximumf %52, %53 : vector<16x32xf32>
    %55 = vector.shape_cast %54 : vector<16x32xf32> to vector<2x8x32xf32>
    %c0_27 = arith.constant 0 : index
    %c0_28 = arith.constant 0 : index
    %56 = vector.load %arg7[%c0_27, %c0_28] : memref<32x32xbf16, #tpu.memory_space<vmem>>, vector<32x32xbf16>
    %cst_29 = arith.constant dense<0.000000e+00> : vector<16x32xf32>
    %57 = tpu.matmul %3, %56, %cst_29 {dimension_numbers = #tpu.dot_dimension_numbers<[1], [0], [0], [1], [0, 0, 1, 1], [], []>} : vector<16x32xbf16>, vector<32x32xbf16>, vector<16x32xf32> -> vector<16x32xf32>
    %cst_30 = arith.constant dense<0.000000e+00> : vector<32xf32>
    %58 = vector.multi_reduction <add>, %57, %cst_30 [0] : vector<16x32xf32> to vector<32xf32>
    %59 = vector.shape_cast %58 : vector<32xf32> to vector<1x32xf32>
    %cst_31 = arith.constant 6.250000e-02 : f32
    %60 = vector.broadcast %cst_31 : f32 to vector<1x32xf32>
    %61 = arith.mulf %59, %60 : vector<1x32xf32>
    %62 = vector.broadcast %61 : vector<1x32xf32> to vector<16x32xf32>
    %63 = arith.subf %57, %62 : vector<16x32xf32>
    %64 = arith.mulf %63, %63 : vector<16x32xf32>
    %cst_32 = arith.constant dense<0.000000e+00> : vector<32xf32>
    %65 = vector.multi_reduction <add>, %64, %cst_32 [0] : vector<16x32xf32> to vector<32xf32>
    %66 = vector.shape_cast %65 : vector<32xf32> to vector<1x32xf32>
    %cst_33 = arith.constant 6.250000e-02 : f32
    %67 = vector.broadcast %cst_33 : f32 to vector<1x32xf32>
    %68 = arith.mulf %66, %67 : vector<1x32xf32>
    %c0_34 = arith.constant 0 : index
    %c0_35 = arith.constant 0 : index
    %69 = vector.load %arg8[%c0_34, %c0_35] : memref<1x32xf32, #tpu.memory_space<vmem>>, vector<1x32xf32>
    %cst_36 = arith.constant 9.99999974E-6 : f32
    %70 = vector.broadcast %cst_36 : f32 to vector<1x32xf32>
    %71 = arith.addf %68, %70 : vector<1x32xf32>
    %72 = math.rsqrt %71 : vector<1x32xf32>
    %73 = arith.mulf %69, %72 : vector<1x32xf32>
    %74 = vector.broadcast %73 : vector<1x32xf32> to vector<16x32xf32>
    %75 = arith.mulf %63, %74 : vector<16x32xf32>
    %c0_37 = arith.constant 0 : index
    %c0_38 = arith.constant 0 : index
    %76 = vector.load %arg9[%c0_37, %c0_38] : memref<1x32xf32, #tpu.memory_space<vmem>>, vector<1x32xf32>
    %77 = vector.broadcast %76 : vector<1x32xf32> to vector<16x32xf32>
    %78 = arith.addf %75, %77 : vector<16x32xf32>
    %cst_39 = arith.constant 0.000000e+00 : f32
    %79 = vector.broadcast %cst_39 : f32 to vector<16x32xf32>
    %80 = arith.maximumf %78, %79 : vector<16x32xf32>
    %81 = vector.shape_cast %80 : vector<16x32xf32> to vector<2x8x32xf32>
    %82 = tpu.transpose %29, [0, 2, 1] : vector<2x8x32xf32> -> vector<2x32x8xf32>
    %83 = arith.truncf %82 : vector<2x32x8xf32> to vector<2x32x8xbf16>
    %84 = arith.truncf %55 : vector<2x8x32xf32> to vector<2x8x32xbf16>
    "tpu.trace_start"() <{level = 10 : i32, message = "nil,nlj->nij"}> : () -> ()
    %cst_40 = arith.constant dense<0.000000e+00> : vector<2x32x32xf32>
    %85 = tpu.matmul %83, %84, %cst_40 {dimension_numbers = #tpu.dot_dimension_numbers<[2], [1], [1], [2], [0, 0, 0, 1, 1, 2], [0], [0]>} : vector<2x32x8xbf16>, vector<2x8x32xbf16>, vector<2x32x32xf32> -> vector<2x32x32xf32>
    "tpu.trace_stop"() : () -> ()
    %cst_41 = arith.constant dense<0xFF800000> : vector<32x32xf32>
    %86 = vector.multi_reduction <maximumf>, %85, %cst_41 [0] : vector<2x32x32xf32> to vector<32x32xf32>
    %87 = vector.shape_cast %86 : vector<32x32xf32> to vector<1x32x32xf32>
    %88 = vector.broadcast %87 : vector<1x32x32xf32> to vector<2x32x32xf32>
    %89 = arith.subf %85, %88 : vector<2x32x32xf32>
    %90 = math.exp %89 : vector<2x32x32xf32>
    %cst_42 = arith.constant dense<0.000000e+00> : vector<32x32xf32>
    %91 = vector.multi_reduction <add>, %90, %cst_42 [0] : vector<2x32x32xf32> to vector<32x32xf32>
    %92 = vector.shape_cast %91 : vector<32x32xf32> to vector<1x32x32xf32>
    %93 = tpu.reciprocal %92 : vector<1x32x32xf32> -> vector<1x32x32xf32>
    %94 = vector.broadcast %93 : vector<1x32x32xf32> to vector<2x32x32xf32>
    %95 = arith.mulf %90, %94 : vector<2x32x32xf32>
    %96 = arith.truncf %81 : vector<2x8x32xf32> to vector<2x8x32xbf16>
    %97 = arith.truncf %95 : vector<2x32x32xf32> to vector<2x32x32xbf16>
    "tpu.trace_start"() <{level = 10 : i32, message = "nlj,nij->nli"}> : () -> ()
    %cst_43 = arith.constant dense<0.000000e+00> : vector<2x8x32xf32>
    %98 = tpu.matmul %96, %97, %cst_43 {dimension_numbers = #tpu.dot_dimension_numbers<[2], [2], [1], [1], [0, 0, 0, 1, 1, 1], [0], [0]>} : vector<2x8x32xbf16>, vector<2x32x32xbf16>, vector<2x8x32xf32> -> vector<2x8x32xf32>
    "tpu.trace_stop"() : () -> ()
    %99 = vector.shape_cast %98 : vector<2x8x32xf32> to vector<16x32xf32>
    %100 = arith.truncf %99 : vector<16x32xf32> to vector<16x32xbf16>
    %c0_44 = arith.constant 0 : index
    %c0_45 = arith.constant 0 : index
    %101 = vector.load %arg10[%c0_44, %c0_45] : memref<32x32xbf16, #tpu.memory_space<vmem>>, vector<32x32xbf16>
    %cst_46 = arith.constant dense<0.000000e+00> : vector<16x32xf32>
    %102 = tpu.matmul %100, %101, %cst_46 {dimension_numbers = #tpu.dot_dimension_numbers<[1], [0], [0], [1], [0, 0, 1, 1], [], []>} : vector<16x32xbf16>, vector<32x32xbf16>, vector<16x32xf32> -> vector<16x32xf32>
    %cst_47 = arith.constant dense<0.000000e+00> : vector<32xf32>
    %103 = vector.multi_reduction <add>, %102, %cst_47 [0] : vector<16x32xf32> to vector<32xf32>
    %104 = vector.shape_cast %103 : vector<32xf32> to vector<1x32xf32>
    %cst_48 = arith.constant 6.250000e-02 : f32
    %105 = vector.broadcast %cst_48 : f32 to vector<1x32xf32>
    %106 = arith.mulf %104, %105 : vector<1x32xf32>
    %107 = vector.broadcast %106 : vector<1x32xf32> to vector<16x32xf32>
    %108 = arith.subf %102, %107 : vector<16x32xf32>
    %109 = arith.mulf %108, %108 : vector<16x32xf32>
    %cst_49 = arith.constant dense<0.000000e+00> : vector<32xf32>
    %110 = vector.multi_reduction <add>, %109, %cst_49 [0] : vector<16x32xf32> to vector<32xf32>
    %111 = vector.shape_cast %110 : vector<32xf32> to vector<1x32xf32>
    %cst_50 = arith.constant 6.250000e-02 : f32
    %112 = vector.broadcast %cst_50 : f32 to vector<1x32xf32>
    %113 = arith.mulf %111, %112 : vector<1x32xf32>
    %c0_51 = arith.constant 0 : index
    %c0_52 = arith.constant 0 : index
    %114 = vector.load %arg11[%c0_51, %c0_52] : memref<1x32xf32, #tpu.memory_space<vmem>>, vector<1x32xf32>
    %cst_53 = arith.constant 9.99999974E-6 : f32
    %115 = vector.broadcast %cst_53 : f32 to vector<1x32xf32>
    %116 = arith.addf %113, %115 : vector<1x32xf32>
    %117 = math.rsqrt %116 : vector<1x32xf32>
    %118 = arith.mulf %114, %117 : vector<1x32xf32>
    %119 = vector.broadcast %118 : vector<1x32xf32> to vector<16x32xf32>
    %120 = arith.mulf %108, %119 : vector<16x32xf32>
    %c0_54 = arith.constant 0 : index
    %c0_55 = arith.constant 0 : index
    %121 = vector.load %arg12[%c0_54, %c0_55] : memref<1x32xf32, #tpu.memory_space<vmem>>, vector<1x32xf32>
    %122 = vector.broadcast %121 : vector<1x32xf32> to vector<16x32xf32>
    %123 = arith.addf %120, %122 : vector<16x32xf32>
    %cst_56 = arith.constant 0.000000e+00 : f32
    %124 = vector.broadcast %cst_56 : f32 to vector<16x32xf32>
    %125 = arith.maximumf %123, %124 : vector<16x32xf32>
    %126 = vector.shape_cast %125 : vector<16x32xf32> to vector<2x8x32xf32>
    %c0_57 = arith.constant 0 : index
    %c0_58 = arith.constant 0 : index
    %127 = vector.load %arg13[%c0_57, %c0_58] : memref<32x32xbf16, #tpu.memory_space<vmem>>, vector<32x32xbf16>
    %cst_59 = arith.constant dense<0.000000e+00> : vector<16x32xf32>
    %128 = tpu.matmul %100, %127, %cst_59 {dimension_numbers = #tpu.dot_dimension_numbers<[1], [0], [0], [1], [0, 0, 1, 1], [], []>} : vector<16x32xbf16>, vector<32x32xbf16>, vector<16x32xf32> -> vector<16x32xf32>
    %cst_60 = arith.constant dense<0.000000e+00> : vector<32xf32>
    %129 = vector.multi_reduction <add>, %128, %cst_60 [0] : vector<16x32xf32> to vector<32xf32>
    %130 = vector.shape_cast %129 : vector<32xf32> to vector<1x32xf32>
    %cst_61 = arith.constant 6.250000e-02 : f32
    %131 = vector.broadcast %cst_61 : f32 to vector<1x32xf32>
    %132 = arith.mulf %130, %131 : vector<1x32xf32>
    %133 = vector.broadcast %132 : vector<1x32xf32> to vector<16x32xf32>
    %134 = arith.subf %128, %133 : vector<16x32xf32>
    %135 = arith.mulf %134, %134 : vector<16x32xf32>
    %cst_62 = arith.constant dense<0.000000e+00> : vector<32xf32>
    %136 = vector.multi_reduction <add>, %135, %cst_62 [0] : vector<16x32xf32> to vector<32xf32>
    %137 = vector.shape_cast %136 : vector<32xf32> to vector<1x32xf32>
    %cst_63 = arith.constant 6.250000e-02 : f32
    %138 = vector.broadcast %cst_63 : f32 to vector<1x32xf32>
    %139 = arith.mulf %137, %138 : vector<1x32xf32>
    %c0_64 = arith.constant 0 : index
    %c0_65 = arith.constant 0 : index
    %140 = vector.load %arg14[%c0_64, %c0_65] : memref<1x32xf32, #tpu.memory_space<vmem>>, vector<1x32xf32>
    %cst_66 = arith.constant 9.99999974E-6 : f32
    %141 = vector.broadcast %cst_66 : f32 to vector<1x32xf32>
    %142 = arith.addf %139, %141 : vector<1x32xf32>
    %143 = math.rsqrt %142 : vector<1x32xf32>
    %144 = arith.mulf %140, %143 : vector<1x32xf32>
    %145 = vector.broadcast %144 : vector<1x32xf32> to vector<16x32xf32>
    %146 = arith.mulf %134, %145 : vector<16x32xf32>
    %c0_67 = arith.constant 0 : index
    %c0_68 = arith.constant 0 : index
    %147 = vector.load %arg15[%c0_67, %c0_68] : memref<1x32xf32, #tpu.memory_space<vmem>>, vector<1x32xf32>
    %148 = vector.broadcast %147 : vector<1x32xf32> to vector<16x32xf32>
    %149 = arith.addf %146, %148 : vector<16x32xf32>
    %cst_69 = arith.constant 0.000000e+00 : f32
    %150 = vector.broadcast %cst_69 : f32 to vector<16x32xf32>
    %151 = arith.maximumf %149, %150 : vector<16x32xf32>
    %152 = vector.shape_cast %151 : vector<16x32xf32> to vector<2x8x32xf32>
    %c0_70 = arith.constant 0 : index
    %c0_71 = arith.constant 0 : index
    %153 = vector.load %arg16[%c0_70, %c0_71] : memref<32x32xbf16, #tpu.memory_space<vmem>>, vector<32x32xbf16>
    %cst_72 = arith.constant dense<0.000000e+00> : vector<16x32xf32>
    %154 = tpu.matmul %100, %153, %cst_72 {dimension_numbers = #tpu.dot_dimension_numbers<[1], [0], [0], [1], [0, 0, 1, 1], [], []>} : vector<16x32xbf16>, vector<32x32xbf16>, vector<16x32xf32> -> vector<16x32xf32>
    %cst_73 = arith.constant dense<0.000000e+00> : vector<32xf32>
    %155 = vector.multi_reduction <add>, %154, %cst_73 [0] : vector<16x32xf32> to vector<32xf32>
    %156 = vector.shape_cast %155 : vector<32xf32> to vector<1x32xf32>
    %cst_74 = arith.constant 6.250000e-02 : f32
    %157 = vector.broadcast %cst_74 : f32 to vector<1x32xf32>
    %158 = arith.mulf %156, %157 : vector<1x32xf32>
    %159 = vector.broadcast %158 : vector<1x32xf32> to vector<16x32xf32>
    %160 = arith.subf %154, %159 : vector<16x32xf32>
    %161 = arith.mulf %160, %160 : vector<16x32xf32>
    %cst_75 = arith.constant dense<0.000000e+00> : vector<32xf32>
    %162 = vector.multi_reduction <add>, %161, %cst_75 [0] : vector<16x32xf32> to vector<32xf32>
    %163 = vector.shape_cast %162 : vector<32xf32> to vector<1x32xf32>
    %cst_76 = arith.constant 6.250000e-02 : f32
    %164 = vector.broadcast %cst_76 : f32 to vector<1x32xf32>
    %165 = arith.mulf %163, %164 : vector<1x32xf32>
    %c0_77 = arith.constant 0 : index
    %c0_78 = arith.constant 0 : index
    %166 = vector.load %arg17[%c0_77, %c0_78] : memref<1x32xf32, #tpu.memory_space<vmem>>, vector<1x32xf32>
    %cst_79 = arith.constant 9.99999974E-6 : f32
    %167 = vector.broadcast %cst_79 : f32 to vector<1x32xf32>
    %168 = arith.addf %165, %167 : vector<1x32xf32>
    %169 = math.rsqrt %168 : vector<1x32xf32>
    %170 = arith.mulf %166, %169 : vector<1x32xf32>
    %171 = vector.broadcast %170 : vector<1x32xf32> to vector<16x32xf32>
    %172 = arith.mulf %160, %171 : vector<16x32xf32>
    %c0_80 = arith.constant 0 : index
    %c0_81 = arith.constant 0 : index
    %173 = vector.load %arg18[%c0_80, %c0_81] : memref<1x32xf32, #tpu.memory_space<vmem>>, vector<1x32xf32>
    %174 = vector.broadcast %173 : vector<1x32xf32> to vector<16x32xf32>
    %175 = arith.addf %172, %174 : vector<16x32xf32>
    %cst_82 = arith.constant 0.000000e+00 : f32
    %176 = vector.broadcast %cst_82 : f32 to vector<16x32xf32>
    %177 = arith.maximumf %175, %176 : vector<16x32xf32>
    %178 = vector.shape_cast %177 : vector<16x32xf32> to vector<2x8x32xf32>
    %179 = tpu.transpose %126, [0, 2, 1] : vector<2x8x32xf32> -> vector<2x32x8xf32>
    %180 = arith.truncf %179 : vector<2x32x8xf32> to vector<2x32x8xbf16>
    %181 = arith.truncf %152 : vector<2x8x32xf32> to vector<2x8x32xbf16>
    "tpu.trace_start"() <{level = 10 : i32, message = "nil,nlj->nij"}> : () -> ()
    %cst_83 = arith.constant dense<0.000000e+00> : vector<2x32x32xf32>
    %182 = tpu.matmul %180, %181, %cst_83 {dimension_numbers = #tpu.dot_dimension_numbers<[2], [1], [1], [2], [0, 0, 0, 1, 1, 2], [0], [0]>} : vector<2x32x8xbf16>, vector<2x8x32xbf16>, vector<2x32x32xf32> -> vector<2x32x32xf32>
    "tpu.trace_stop"() : () -> ()
    %cst_84 = arith.constant dense<0xFF800000> : vector<32x32xf32>
    %183 = vector.multi_reduction <maximumf>, %182, %cst_84 [0] : vector<2x32x32xf32> to vector<32x32xf32>
    %184 = vector.shape_cast %183 : vector<32x32xf32> to vector<1x32x32xf32>
    %185 = vector.broadcast %184 : vector<1x32x32xf32> to vector<2x32x32xf32>
    %186 = arith.subf %182, %185 : vector<2x32x32xf32>
    %187 = math.exp %186 : vector<2x32x32xf32>
    %cst_85 = arith.constant dense<0.000000e+00> : vector<32x32xf32>
    %188 = vector.multi_reduction <add>, %187, %cst_85 [0] : vector<2x32x32xf32> to vector<32x32xf32>
    %189 = vector.shape_cast %188 : vector<32x32xf32> to vector<1x32x32xf32>
    %190 = tpu.reciprocal %189 : vector<1x32x32xf32> -> vector<1x32x32xf32>
    %191 = vector.broadcast %190 : vector<1x32x32xf32> to vector<2x32x32xf32>
    %192 = arith.mulf %187, %191 : vector<2x32x32xf32>
    %193 = arith.truncf %178 : vector<2x8x32xf32> to vector<2x8x32xbf16>
    %194 = arith.truncf %192 : vector<2x32x32xf32> to vector<2x32x32xbf16>
    "tpu.trace_start"() <{level = 10 : i32, message = "nlj,nij->nli"}> : () -> ()
    %cst_86 = arith.constant dense<0.000000e+00> : vector<2x8x32xf32>
    %195 = tpu.matmul %193, %194, %cst_86 {dimension_numbers = #tpu.dot_dimension_numbers<[2], [2], [1], [1], [0, 0, 0, 1, 1, 1], [0], [0]>} : vector<2x8x32xbf16>, vector<2x32x32xbf16>, vector<2x8x32xf32> -> vector<2x8x32xf32>
    "tpu.trace_stop"() : () -> ()
    %196 = vector.shape_cast %195 : vector<2x8x32xf32> to vector<16x32xf32>
    %197 = vector.shape_cast %196 : vector<16x32xf32> to vector<2x8x32xf32>
    %198 = tpu.transpose %197, [0, 2, 1] : vector<2x8x32xf32> -> vector<2x32x8xf32>
    %c0_87 = arith.constant 0 : index
    %c0_88 = arith.constant 0 : index
    %c0_89 = arith.constant 0 : index
    %199 = vector.load %arg19[%c0_87, %c0_88, %c0_89] : memref<2x32x8xf32, #tpu.memory_space<vmem>>, vector<2x32x8xf32>
    tpu.vector_store %arg19[%c0_87, %c0_88, %c0_89], %198 {strides = array<i32>} : memref<2x32x8xf32, #tpu.memory_space<vmem>>, vector<2x32x8xf32>,
    return
  }
}

</mosaic_0001>

<llo_original>
// kernel: tpu_custom_call.1
$region0: #{tpu_custom_call.1}
  #allocation0 [shape = 'u32[]', space=smem, size = 0x4, offset = 0x4, fixed_abs, tag = 'smem constant byte address 0x4 - core index']
  #allocation1 [shape = 'u32[144,128]{1,0:T(1,128)}', space=vmem, size = 0x12000, scoped, tag = 'internal scratch']
  %s0 = inlined_call_operand.vmem [shape: f32[2,32,8], index: 0, kind: input, shape index: {}]
  %s1 = inlined_call_operand.vmem [shape: bf16[32,32], index: 1, kind: input, shape index: {}]
  %s2 = inlined_call_operand.vmem [shape: f32[1,32], index: 2, kind: input, shape index: {}]
  %s3 = inlined_call_operand.vmem [shape: f32[1,32], index: 3, kind: input, shape index: {}]
  %s4 = inlined_call_operand.vmem [shape: bf16[32,32], index: 4, kind: input, shape index: {}]
  %s5 = inlined_call_operand.hbm [shape: f32[1,32], index: 5, kind: input, shape index: {}]
  %s6 = inlined_call_operand.vmem [shape: f32[1,32], index: 6, kind: input, shape index: {}]
  %s7 = inlined_call_operand.vmem [shape: bf16[32,32], index: 7, kind: input, shape index: {}]
  %s8 = inlined_call_operand.vmem [shape: f32[1,32], index: 8, kind: input, shape index: {}]
  %s9 = inlined_call_operand.vmem [shape: f32[1,32], index: 9, kind: input, shape index: {}]
  %s10 = inlined_call_operand.vmem [shape: bf16[32,32], index: 10, kind: input, shape index: {}]
  %s11 = inlined_call_operand.vmem [shape: f32[1,32], index: 11, kind: input, shape index: {}]
  %s12 = inlined_call_operand.vmem [shape: f32[1,32], index: 12, kind: input, shape index: {}]
  %s13 = inlined_call_operand.vmem [shape: bf16[32,32], index: 13, kind: input, shape index: {}]
  %s14 = inlined_call_operand.vmem [shape: f32[1,32], index: 14, kind: input, shape index: {}]
  %s15 = inlined_call_operand.vmem [shape: f32[1,32], index: 15, kind: input, shape index: {}]
  %s16 = inlined_call_operand.vmem [shape: bf16[32,32], index: 16, kind: input, shape index: {}]
  %s17 = inlined_call_operand.vmem [shape: f32[1,32], index: 17, kind: input, shape index: {}]
  %s18 = inlined_call_operand.vmem [shape: f32[1,32], index: 18, kind: input, shape index: {}]
  %s19 = inlined_call_operand.vmem [shape: f32[2,32,8], index: 19, kind: output, shape index: {}]
  %s20 = sld [smem:[#allocation0]]
  $region90: #{tpu_custom_call.1} parent=0
    _
  %s22 = ssub.s32 1, %s20
  %s23 = scalar_select 0, %s22, %s20
  $region1: #{tpu_custom_call.1} parent=0
    #allocation2 [shape = 'u8[512]{0}', space=vmem, size = 0x400, scoped, tag = 'input window, operand 5, single buffered']
    #allocation3 [shape = 's32[1]{0}', space=sflag, size = 0x4, scoped, tag = 'scoped memory for tpu_custom_call.1']
    %24 = vsyncpa [#allocation3], 0
    // Predicated region
    $region2: #{tpu_custom_call.1} parent=1 // pred_check
      _
    $region3: #{tpu_custom_call.1} parent=1 // pred_check_branch
      %26 = sbr.rel (0) target = $region5
    $region4: #{tpu_custom_call.1} parent=1 // pred_region
      _
    $region5: #{tpu_custom_call.1} parent=1 // pred_fallthru
      _
    // Predicated region
    $region6: #{tpu_custom_call.1} parent=1 // pred_check
      _
    $region7: #{tpu_custom_call.1} parent=1 // pred_check_branch
      %28 = sbr.rel (0) target = $region9
    $region8: #{tpu_custom_call.1} parent=1 // pred_region
      _
    $region9: #{tpu_custom_call.1} parent=1 // pred_fallthru
      _
    // Predicated region
    $region10: #{tpu_custom_call.1} parent=1 // pred_check
      _
    $region11: #{tpu_custom_call.1} parent=1 // pred_check_branch
      %30 = sbr.rel (0) target = $region13
    $region12: #{tpu_custom_call.1} parent=1 // pred_region
      _
    $region13: #{tpu_custom_call.1} parent=1 // pred_fallthru
      _
    // Predicated region
    $region14: #{tpu_custom_call.1} parent=1 // pred_check
      _
    $region15: #{tpu_custom_call.1} parent=1 // pred_check_branch
      %32 = sbr.rel (0) target = $region17
    $region16: #{tpu_custom_call.1} parent=1 // pred_region
      _
    $region17: #{tpu_custom_call.1} parent=1 // pred_fallthru
      _
    // Predicated region
    $region18: #{tpu_custom_call.1} parent=1 // pred_check
      _
    $region19: #{tpu_custom_call.1} parent=1 // pred_check_branch
      %34 = sbr.rel (0) target = $region21
    $region20: #{tpu_custom_call.1} parent=1 // pred_region
      _
    $region21: #{tpu_custom_call.1} parent=1 // pred_fallthru
      _
    // Predicated region
    $region22: #{tpu_custom_call.1} parent=1 // pred_check
      _
    $region23: #{tpu_custom_call.1} parent=1 // pred_check_branch
      %36 = sbr.rel (0) target = $region25
    $region24: #{tpu_custom_call.1} parent=1 // pred_region
      %s38 = ssub.s32 16, 16
      %39 = vsyncadd [#allocation3], %s38
      %s41 = sshll.u32 [#allocation2], 4
      %s42 = int_to_ptr.vmem [resolvable:$true] %s41
      %44 = dma.hbm_to_vmem [thread:$0]  %s5, 16, %s42, [#allocation3]
    $region25: #{tpu_custom_call.1} parent=1 // pred_fallthru
      _
    // Predicated region
    $region26: #{tpu_custom_call.1} parent=1 // pred_check
      _
    $region27: #{tpu_custom_call.1} parent=1 // pred_check_branch
      %46 = sbr.rel (0) target = $region29
    $region28: #{tpu_custom_call.1} parent=1 // pred_region
      _
    $region29: #{tpu_custom_call.1} parent=1 // pred_fallthru
      _
    // Predicated region
    $region30: #{tpu_custom_call.1} parent=1 // pred_check
      _
    $region31: #{tpu_custom_call.1} parent=1 // pred_check_branch
      %48 = sbr.rel (0) target = $region33
    $region32: #{tpu_custom_call.1} parent=1 // pred_region
      _
    $region33: #{tpu_custom_call.1} parent=1 // pred_fallthru
      _
    // Predicated region
    $region34: #{tpu_custom_call.1} parent=1 // pred_check
      _
    $region35: #{tpu_custom_call.1} parent=1 // pred_check_branch
      %50 = sbr.rel (0) target = $region37
    $region36: #{tpu_custom_call.1} parent=1 // pred_region
      _
    $region37: #{tpu_custom_call.1} parent=1 // pred_fallthru
      _
    // Predicated region
    $region38: #{tpu_custom_call.1} parent=1 // pred_check
      _
    $region39: #{tpu_custom_call.1} parent=1 // pred_check_branch
      %52 = sbr.rel (0) target = $region41
    $region40: #{tpu_custom_call.1} parent=1 // pred_region
      _
    $region41: #{tpu_custom_call.1} parent=1 // pred_fallthru
      _
    // Predicated region
    $region42: #{tpu_custom_call.1} parent=1 // pred_check
      _
    $region43: #{tpu_custom_call.1} parent=1 // pred_check_branch
      %54 = sbr.rel (0) target = $region45
    $region44: #{tpu_custom_call.1} parent=1 // pred_region
      _
    $region45: #{tpu_custom_call.1} parent=1 // pred_fallthru
      _
    // Predicated region
    $region46: #{tpu_custom_call.1} parent=1 // pred_check
      _
    $region47: #{tpu_custom_call.1} parent=1 // pred_check_branch
      %56 = sbr.rel (0) target = $region49
    $region48: #{tpu_custom_call.1} parent=1 // pred_region
      _
    $region49: #{tpu_custom_call.1} parent=1 // pred_fallthru
      _
    // Predicated region
    $region50: #{tpu_custom_call.1} parent=1 // pred_check
      _
    $region51: #{tpu_custom_call.1} parent=1 // pred_check_branch
      %58 = sbr.rel (0) target = $region53
    $region52: #{tpu_custom_call.1} parent=1 // pred_region
      _
    $region53: #{tpu_custom_call.1} parent=1 // pred_fallthru
      _
    // Predicated region
    $region54: #{tpu_custom_call.1} parent=1 // pred_check
      _
    $region55: #{tpu_custom_call.1} parent=1 // pred_check_branch
      %60 = sbr.rel (0) target = $region57
    $region56: #{tpu_custom_call.1} parent=1 // pred_region
      _
    $region57: #{tpu_custom_call.1} parent=1 // pred_fallthru
      _
    // Predicated region
    $region58: #{tpu_custom_call.1} parent=1 // pred_check
      _
    $region59: #{tpu_custom_call.1} parent=1 // pred_check_branch
      %62 = sbr.rel (0) target = $region61
    $region60: #{tpu_custom_call.1} parent=1 // pred_region
      _
    $region61: #{tpu_custom_call.1} parent=1 // pred_fallthru
      _
    // Predicated region
    $region62: #{tpu_custom_call.1} parent=1 // pred_check
      _
    $region63: #{tpu_custom_call.1} parent=1 // pred_check_branch
      %64 = sbr.rel (0) target = $region65
    $region64: #{tpu_custom_call.1} parent=1 // pred_region
      _
    $region65: #{tpu_custom_call.1} parent=1 // pred_fallthru
      _
    // Predicated region
    $region66: #{tpu_custom_call.1} parent=1 // pred_check
      _
    $region67: #{tpu_custom_call.1} parent=1 // pred_check_branch
      %66 = sbr.rel (0) target = $region69
    $region68: #{tpu_custom_call.1} parent=1 // pred_region
      _
    $region69: #{tpu_custom_call.1} parent=1 // pred_fallthru
      _
    // Predicated region
    $region70: #{tpu_custom_call.1} parent=1 // pred_check
      _
    $region71: #{tpu_custom_call.1} parent=1 // pred_check_branch
      %68 = sbr.rel (0) target = $region73
    $region72: #{tpu_custom_call.1} parent=1 // pred_region
      _
    $region73: #{tpu_custom_call.1} parent=1 // pred_fallthru
      _
    // Predicated region
    $region74: #{tpu_custom_call.1} parent=1 // pred_check
      _
    $region75: #{tpu_custom_call.1} parent=1 // pred_check_branch
      %70 = sbr.rel (0) target = $region77
    $region76: #{tpu_custom_call.1} parent=1 // pred_region
      _
    $region77: #{tpu_custom_call.1} parent=1 // pred_fallthru
      _
    // Predicated region
    $region78: #{tpu_custom_call.1} parent=1 // pred_check
      _
    $region79: #{tpu_custom_call.1} parent=1 // pred_check_branch
      %72 = sbr.rel (0) target = $region81
    $region80: #{tpu_custom_call.1} parent=1 // pred_region
      %73 = dma.done [#allocation3], 16
    $region81: #{tpu_custom_call.1} parent=1 // pred_fallthru
      _
    %v75 = vld [vmem:[%s0] sm:$0xff]
    %v76 = vld [vmem:[%s0 + $0x8] sm:$0xff]
    %v77 = vld [vmem:[%s0 + $0x10] sm:$0xff]
    %v78 = vld [vmem:[%s0 + $0x18] sm:$0xff]
    %v79 = vld [vmem:[%s0 + $0x20] sm:$0xff]
    %v80 = vld [vmem:[%s0 + $0x28] sm:$0xff]
    %v81 = vld [vmem:[%s0 + $0x30] sm:$0xff]
    %v82 = vld [vmem:[%s0 + $0x38] sm:$0xff]
    %83 = vxpose.xlu0.b32.start [1/16] %v75, 128
    %84 = vxpose.xlu0.b32.cont [2/16] %v76, 128
    %85 = vxpose.xlu0.b32.cont [3/16] %v77, 128
    %86 = vxpose.xlu0.b32.cont [4/16] %v78, 128
    %87 = vxpose.xlu0.b32.cont [5/16] 0.0, 128
    %88 = vxpose.xlu0.b32.cont [6/16] 0.0, 128
    %89 = vxpose.xlu0.b32.cont [7/16] 0.0, 128
    %90 = vxpose.xlu0.b32.cont [8/16] 0.0, 128
    %91 = vxpose.xlu0.b32.cont [9/16] 0.0, 128
    %92 = vxpose.xlu0.b32.cont [10/16] 0.0, 128
    %93 = vxpose.xlu0.b32.cont [11/16] 0.0, 128
    %94 = vxpose.xlu0.b32.cont [12/16] 0.0, 128
    %95 = vxpose.xlu0.b32.cont [13/16] 0.0, 128
    %96 = vxpose.xlu0.b32.cont [14/16] 0.0, 128
    %97 = vxpose.xlu0.b32.cont [15/16] 0.0, 128
    %98 = vxpose.xlu0.b32.end [16/16] 0.0, 128
    %v99 = vpop.trf.xlu0
    %v100 = vpop.trf.xlu0
    %v101 = vpop.trf.xlu0
    %v102 = vpop.trf.xlu0
    %v103 = vpop.trf.xlu0
    %v104 = vpop.trf.xlu0
    %v105 = vpop.trf.xlu0
    %v106 = vpop.trf.xlu0
    %v107 = vpop.trf.xlu0
    %v108 = vpop.trf.xlu0
    %v109 = vpop.trf.xlu0
    %v110 = vpop.trf.xlu0
    %v111 = vpop.trf.xlu0
    %v112 = vpop.trf.xlu0
    %v113 = vpop.trf.xlu0
    %v114 = vpop.trf.xlu0
    %115 = vxpose.xlu0.b32.start [1/16] %v79, 128
    %116 = vxpose.xlu0.b32.cont [2/16] %v80, 128
    %117 = vxpose.xlu0.b32.cont [3/16] %v81, 128
    %118 = vxpose.xlu0.b32.cont [4/16] %v82, 128
    %119 = vxpose.xlu0.b32.cont [5/16] 0.0, 128
    %120 = vxpose.xlu0.b32.cont [6/16] 0.0, 128
    %121 = vxpose.xlu0.b32.cont [7/16] 0.0, 128
    %122 = vxpose.xlu0.b32.cont [8/16] 0.0, 128
    %123 = vxpose.xlu0.b32.cont [9/16] 0.0, 128
    %124 = vxpose.xlu0.b32.cont [10/16] 0.0, 128
    %125 = vxpose.xlu0.b32.cont [11/16] 0.0, 128
    %126 = vxpose.xlu0.b32.cont [12/16] 0.0, 128
    %127 = vxpose.xlu0.b32.cont [13/16] 0.0, 128
    %128 = vxpose.xlu0.b32.cont [14/16] 0.0, 128
    %129 = vxpose.xlu0.b32.cont [15/16] 0.0, 128
    %130 = vxpose.xlu0.b32.end [16/16] 0.0, 128
    %v131 = vpop.trf.xlu0
    %v132 = vpop.trf.xlu0
    %v133 = vpop.trf.xlu0
    %v134 = vpop.trf.xlu0
    %v135 = vpop.trf.xlu0
    %v136 = vpop.trf.xlu0
    %v137 = vpop.trf.xlu0
    %v138 = vpop.trf.xlu0
    %v139 = vpop.trf.xlu0
    %v140 = vpop.trf.xlu0
    %v141 = vpop.trf.xlu0
    %v142 = vpop.trf.xlu0
    %v143 = vpop.trf.xlu0
    %v144 = vpop.trf.xlu0
    %v145 = vpop.trf.xlu0
    %v146 = vpop.trf.xlu0
    %v147 = vpack.c.bf16 %v131, %v99
    %v148 = vld [vmem:[%s1] sm:$0xf]
    %v149 = vld [vmem:[%s1 + $0x4] sm:$0xf]
    %v150 = vld [vmem:[%s1 + $0x8] sm:$0xf]
    %v151 = vld [vmem:[%s1 + $0xc] sm:$0xf]
    %v156 = vunpack.c.l.b16 %v148
    %v157 = vunpack.c.l.b16 %v149
    %v158 = vunpack.c.l.b16 %v150
    %v159 = vunpack.c.l.b16 %v151
    %v160 = vpack.c.b16 %v157, %v156
    %v161 = vpack.c.b16 %v159, %v158
    %vm164 = vcmask 261120
    %v166 = vsel %vm164, %v147, 0
    %168 = vmatprep.subr.bf16.mxu0 0
    %169 = vmatpush1.bf16.msra.mxu0 %v160
    %170 = vmatprep.subr.bf16.mxu0 0
    %171 = vmatpush1.bf16.msra.mxu0 %v161
    %172 = vmatprep.subr.bf16.mxu0 0
    %173 = vmatpush1.bf16.msra.mxu0 0
    %174 = vmatprep.subr.bf16.mxu0 0
    %175 = vmatpush1.bf16.msra.mxu0 0
    %176 = vmatprep.subr.bf16.mxu0 0
    %177 = vmatpush1.bf16.msra.mxu0 0
    %178 = vmatprep.subr.bf16.mxu0 0
    %179 = vmatpush1.bf16.msra.mxu0 0
    %180 = vmatprep.subr.bf16.mxu0 0
    %181 = vmatpush1.bf16.msra.mxu0 0
    %182 = vmatprep.subr.bf16.mxu0 0
    %183 = vmatpush1.bf16.msra.mxu0 0
    %184 = vmatprep.subr.bf16.mxu0 0
    %185 = vmatpush1.bf16.msra.mxu0 0
    %186 = vmatprep.subr.bf16.mxu0 0
    %187 = vmatpush1.bf16.msra.mxu0 0
    %188 = vmatprep.subr.bf16.mxu0 0
    %189 = vmatpush1.bf16.msra.mxu0 0
    %190 = vmatprep.subr.bf16.mxu0 0
    %191 = vmatpush1.bf16.msra.mxu0 0
    %192 = vmatprep.subr.bf16.mxu0 0
    %193 = vmatpush1.bf16.msra.mxu0 0
    %194 = vmatprep.subr.bf16.mxu0 0
    %195 = vmatpush1.bf16.msra.mxu0 0
    %196 = vmatprep.subr.bf16.mxu0 0
    %197 = vmatpush1.bf16.msra.mxu0 0
    %198 = vmatprep.subr.bf16.mxu0 0
    %199 = vmatpush1.bf16.msra.mxu0 0
    %200 = vmatprep.mubr.bf16.mxu0 0
    %201 = vmatmul.mubr.bf16.gmra.mrb[0].mxu0 %v166
    %v202 = vpop.f32.mrb[0].mxu0
    %v203 = vadd.f32 0.0, %v202
    %v204 = vpop.f32.mrb[0].mxu0
    %v205 = vpop.f32.mrb[0].mxu0
    %v206 = vadd.f32 0.0, %v205
    %v207 = vpop.f32.mrb[0].mxu0
    %208 = vdwg.mxu0
    %v209 = vsel %vm164, %v203, 0.0
    %v210 = vsel %vm164, %v206, 0.0
    %v211 = vadd.f32 %v209, %v210
    %v212 = vrot.slane %v211, 4
    %v213 = vadd.f32 %v211, %v212
    %v214 = vrot.slane %v213, 2
    %v215 = vadd.f32 %v213, %v214
    %v216 = vrot.slane %v215, 1
    %v217 = vadd.f32 %v215, %v216
    %v218 = vmul.f32 %v217, 0.0625
    %v219 = vsub.f32 %v203, %v218
    %v220 = vsub.f32 %v206, %v218
    %v221 = vmul.f32 %v219, %v219
    %v222 = vmul.f32 %v220, %v220
    %v223 = vsel %vm164, %v221, 0.0
    %v224 = vsel %vm164, %v222, 0.0
    %v225 = vadd.f32 %v223, %v224
    %v226 = vrot.slane %v225, 4
    %v227 = vadd.f32 %v225, %v226
    %v228 = vrot.slane %v227, 2
    %v229 = vadd.f32 %v227, %v228
    %v230 = vrot.slane %v229, 1
    %v231 = vadd.f32 %v229, %v230
    %v232 = vmul.f32 %v231, 0.0625
    %v233 = vld [vmem:[%s2] sm:$0x1]
    %v234 = vadd.f32 %v232, 1e-05
    %v235 = vrsqrt.pop %v234
    %v236 = vmul.f32 %v233, %v235
    %v238 = vlaneseq
    %v239 = vshrl.u32 %v238, 7
    %v240 = vsub.s32 0, %v239
    %v241 = vrot.slane %v236, %v240
    %v243 = vmul.f32 %v219, %v241
    %v244 = vmul.f32 %v220, %v241
    %v245 = vld [vmem:[%s3] sm:$0x1]
    %v247 = vlaneseq
    %v248 = vshrl.u32 %v247, 7
    %v249 = vsub.s32 0, %v248
    %v250 = vrot.slane %v245, %v249
    %v252 = vadd.f32 %v243, %v250
    %v253 = vadd.f32 %v244, %v250
    %v254 = vmax.f32 %v252, 0.0
    %v255 = vmax.f32 %v253, 0.0
    %v256 = vld [vmem:[%s4] sm:$0xf]
    %v257 = vld [vmem:[%s4 + $0x4] sm:$0xf]
    %v258 = vld [vmem:[%s4 + $0x8] sm:$0xf]
    %v259 = vld [vmem:[%s4 + $0xc] sm:$0xf]
    %v264 = vunpack.c.l.b16 %v256
    %v265 = vunpack.c.l.b16 %v257
    %v266 = vunpack.c.l.b16 %v258
    %v267 = vunpack.c.l.b16 %v259
    %v268 = vpack.c.b16 %v265, %v264
    %v269 = vpack.c.b16 %v267, %v266
    %272 = vmatprep.subr.bf16.mxu0 0
    %273 = vmatpush1.bf16.msra.mxu0 %v268
    %274 = vmatprep.subr.bf16.mxu0 0
    %275 = vmatpush1.bf16.msra.mxu0 %v269
    %276 = vmatprep.subr.bf16.mxu0 0
    %277 = vmatpush1.bf16.msra.mxu0 0
    %278 = vmatprep.subr.bf16.mxu0 0
    %279 = vmatpush1.bf16.msra.mxu0 0
    %280 = vmatprep.subr.bf16.mxu0 0
    %281 = vmatpush1.bf16.msra.mxu0 0
    %282 = vmatprep.subr.bf16.mxu0 0
    %283 = vmatpush1.bf16.msra.mxu0 0
    %284 = vmatprep.subr.bf16.mxu0 0
    %285 = vmatpush1.bf16.msra.mxu0 0
    %286 = vmatprep.subr.bf16.mxu0 0
    %287 = vmatpush1.bf16.msra.mxu0 0
    %288 = vmatprep.subr.bf16.mxu0 0
    %289 = vmatpush1.bf16.msra.mxu0 0
    %290 = vmatprep.subr.bf16.mxu0 0
    %291 = vmatpush1.bf16.msra.mxu0 0
    %292 = vmatprep.subr.bf16.mxu0 0
    %293 = vmatpush1.bf16.msra.mxu0 0
    %294 = vmatprep.subr.bf16.mxu0 0
    %295 = vmatpush1.bf16.msra.mxu0 0
    %296 = vmatprep.subr.bf16.mxu0 0
    %297 = vmatpush1.bf16.msra.mxu0 0
    %298 = vmatprep.subr.bf16.mxu0 0
    %299 = vmatpush1.bf16.msra.mxu0 0
    %300 = vmatprep.subr.bf16.mxu0 0
    %301 = vmatpush1.bf16.msra.mxu0 0
    %302 = vmatprep.subr.bf16.mxu0 0
    %303 = vmatpush1.bf16.msra.mxu0 0
    %304 = vmatprep.mubr.bf16.mxu0 0
    %305 = vmatmul.mubr.bf16.gmra.mrb[0].mxu0 %v166
    %v306 = vpop.f32.mrb[0].mxu0
    %v307 = vadd.f32 0.0, %v306
    %v308 = vpop.f32.mrb[0].mxu0
    %v309 = vpop.f32.mrb[0].mxu0
    %v310 = vadd.f32 0.0, %v309
    %v311 = vpop.f32.mrb[0].mxu0
    %312 = vdwg.mxu0
    %v313 = vsel %vm164, %v307, 0.0
    %v314 = vsel %vm164, %v310, 0.0
    %v315 = vadd.f32 %v313, %v314
    %v316 = vrot.slane %v315, 4
    %v317 = vadd.f32 %v315, %v316
    %v318 = vrot.slane %v317, 2
    %v319 = vadd.f32 %v317, %v318
    %v320 = vrot.slane %v319, 1
    %v321 = vadd.f32 %v319, %v320
    %v322 = vmul.f32 %v321, 0.0625
    %v323 = vsub.f32 %v307, %v322
    %v324 = vsub.f32 %v310, %v322
    %v325 = vmul.f32 %v323, %v323
    %v326 = vmul.f32 %v324, %v324
    %v327 = vsel %vm164, %v325, 0.0
    %v328 = vsel %vm164, %v326, 0.0
    %v329 = vadd.f32 %v327, %v328
    %v330 = vrot.slane %v329, 4
    %v331 = vadd.f32 %v329, %v330
    %v332 = vrot.slane %v331, 2
    %v333 = vadd.f32 %v331, %v332
    %v334 = vrot.slane %v333, 1
    %v335 = vadd.f32 %v333, %v334
    %v336 = vmul.f32 %v335, 0.0625
    %v337 = vld [vmem:[#allocation2] sm:$0x1]
    %v338 = vadd.f32 %v336, 1e-05
    %v339 = vrsqrt.pop %v338
    %v340 = vmul.f32 %v337, %v339
    %v342 = vlaneseq
    %v343 = vshrl.u32 %v342, 7
    %v344 = vsub.s32 0, %v343
    %v345 = vrot.slane %v340, %v344
    %v347 = vmul.f32 %v323, %v345
    %v348 = vmul.f32 %v324, %v345
    %v349 = vld [vmem:[%s6] sm:$0x1]
    %v351 = vlaneseq
    %v352 = vshrl.u32 %v351, 7
    %v353 = vsub.s32 0, %v352
    %v354 = vrot.slane %v349, %v353
    %v356 = vadd.f32 %v347, %v354
    %v357 = vadd.f32 %v348, %v354
    %v358 = vmax.f32 %v356, 0.0
    %v359 = vmax.f32 %v357, 0.0
    %v360 = vld [vmem:[%s7] sm:$0xf]
    %v361 = vld [vmem:[%s7 + $0x4] sm:$0xf]
    %v362 = vld [vmem:[%s7 + $0x8] sm:$0xf]
    %v363 = vld [vmem:[%s7 + $0xc] sm:$0xf]
    %v368 = vunpack.c.l.b16 %v360
    %v369 = vunpack.c.l.b16 %v361
    %v370 = vunpack.c.l.b16 %v362
    %v371 = vunpack.c.l.b16 %v363
    %v372 = vpack.c.b16 %v369, %v368
    %v373 = vpack.c.b16 %v371, %v370
    %376 = vmatprep.subr.bf16.mxu0 0
    %377 = vmatpush1.bf16.msra.mxu0 %v372
    %378 = vmatprep.subr.bf16.mxu0 0
    %379 = vmatpush1.bf16.msra.mxu0 %v373
    %380 = vmatprep.subr.bf16.mxu0 0
    %381 = vmatpush1.bf16.msra.mxu0 0
    %382 = vmatprep.subr.bf16.mxu0 0
    %383 = vmatpush1.bf16.msra.mxu0 0
    %384 = vmatprep.subr.bf16.mxu0 0
    %385 = vmatpush1.bf16.msra.mxu0 0
    %386 = vmatprep.subr.bf16.mxu0 0
    %387 = vmatpush1.bf16.msra.mxu0 0
    %388 = vmatprep.subr.bf16.mxu0 0
    %389 = vmatpush1.bf16.msra.mxu0 0
    %390 = vmatprep.subr.bf16.mxu0 0
    %391 = vmatpush1.bf16.msra.mxu0 0
    %392 = vmatprep.subr.bf16.mxu0 0
    %393 = vmatpush1.bf16.msra.mxu0 0
    %394 = vmatprep.subr.bf16.mxu0 0
    %395 = vmatpush1.bf16.msra.mxu0 0
    %396 = vmatprep.subr.bf16.mxu0 0
    %397 = vmatpush1.bf16.msra.mxu0 0
    %398 = vmatprep.subr.bf16.mxu0 0
    %399 = vmatpush1.bf16.msra.mxu0 0
    %400 = vmatprep.subr.bf16.mxu0 0
    %401 = vmatpush1.bf16.msra.mxu0 0
    %402 = vmatprep.subr.bf16.mxu0 0
    %403 = vmatpush1.bf16.msra.mxu0 0
    %404 = vmatprep.subr.bf16.mxu0 0
    %405 = vmatpush1.bf16.msra.mxu0 0
    %406 = vmatprep.subr.bf16.mxu0 0
    %407 = vmatpush1.bf16.msra.mxu0 0
    %408 = vmatprep.mubr.bf16.mxu0 0
    %409 = vmatmul.mubr.bf16.gmra.mrb[0].mxu0 %v166
    %v410 = vpop.f32.mrb[0].mxu0
    %v411 = vadd.f32 0.0, %v410
    %v412 = vpop.f32.mrb[0].mxu0
    %v413 = vpop.f32.mrb[0].mxu0
    %v414 = vadd.f32 0.0, %v413
    %v415 = vpop.f32.mrb[0].mxu0
    %416 = vdwg.mxu0
    %v417 = vsel %vm164, %v411, 0.0
    %v418 = vsel %vm164, %v414, 0.0
    %v419 = vadd.f32 %v417, %v418
    %v420 = vrot.slane %v419, 4
    %v421 = vadd.f32 %v419, %v420
    %v422 = vrot.slane %v421, 2
    %v423 = vadd.f32 %v421, %v422
    %v424 = vrot.slane %v423, 1
    %v425 = vadd.f32 %v423, %v424
    %v426 = vmul.f32 %v425, 0.0625
    %v427 = vsub.f32 %v411, %v426
    %v428 = vsub.f32 %v414, %v426
    %v429 = vmul.f32 %v427, %v427
    %v430 = vmul.f32 %v428, %v428
    %v431 = vsel %vm164, %v429, 0.0
    %v432 = vsel %vm164, %v430, 0.0
    %v433 = vadd.f32 %v431, %v432
    %v434 = vrot.slane %v433, 4
    %v435 = vadd.f32 %v433, %v434
    %v436 = vrot.slane %v435, 2
    %v437 = vadd.f32 %v435, %v436
    %v438 = vrot.slane %v437, 1
    %v439 = vadd.f32 %v437, %v438
    %v440 = vmul.f32 %v439, 0.0625
    %v441 = vld [vmem:[%s8] sm:$0x1]
    %v442 = vadd.f32 %v440, 1e-05
    %v443 = vrsqrt.pop %v442
    %v444 = vmul.f32 %v441, %v443
    %v446 = vlaneseq
    %v447 = vshrl.u32 %v446, 7
    %v448 = vsub.s32 0, %v447
    %v449 = vrot.slane %v444, %v448
    %v451 = vmul.f32 %v427, %v449
    %v452 = vmul.f32 %v428, %v449
    %v453 = vld [vmem:[%s9] sm:$0x1]
    %v455 = vlaneseq
    %v456 = vshrl.u32 %v455, 7
    %v457 = vsub.s32 0, %v456
    %v458 = vrot.slane %v453, %v457
    %v460 = vadd.f32 %v451, %v458
    %v461 = vadd.f32 %v452, %v458
    %v462 = vmax.f32 %v460, 0.0
    %v463 = vmax.f32 %v461, 0.0
    %464 = vxpose.xlu0.b32.start [1/16] %v254, 128
    %465 = vxpose.xlu0.b32.cont [2/16] 0.0, 128
    %466 = vxpose.xlu0.b32.cont [3/16] 0.0, 128
    %467 = vxpose.xlu0.b32.cont [4/16] 0.0, 128
    %468 = vxpose.xlu0.b32.cont [5/16] 0.0, 128
    %469 = vxpose.xlu0.b32.cont [6/16] 0.0, 128
    %470 = vxpose.xlu0.b32.cont [7/16] 0.0, 128
    %471 = vxpose.xlu0.b32.cont [8/16] 0.0, 128
    %472 = vxpose.xlu0.b32.cont [9/16] 0.0, 128
    %473 = vxpose.xlu0.b32.cont [10/16] 0.0, 128
    %474 = vxpose.xlu0.b32.cont [11/16] 0.0, 128
    %475 = vxpose.xlu0.b32.cont [12/16] 0.0, 128
    %476 = vxpose.xlu0.b32.cont [13/16] 0.0, 128
    %477 = vxpose.xlu0.b32.cont [14/16] 0.0, 128
    %478 = vxpose.xlu0.b32.cont [15/16] 0.0, 128
    %479 = vxpose.xlu0.b32.end [16/16] 0.0, 128
    %v480 = vpop.trf.xlu0
    %v481 = vpop.trf.xlu0
    %v482 = vpop.trf.xlu0
    %v483 = vpop.trf.xlu0
    %v484 = vpop.trf.xlu0
    %v485 = vpop.trf.xlu0
    %v486 = vpop.trf.xlu0
    %v487 = vpop.trf.xlu0
    %v488 = vpop.trf.xlu0
    %v489 = vpop.trf.xlu0
    %v490 = vpop.trf.xlu0
    %v491 = vpop.trf.xlu0
    %v492 = vpop.trf.xlu0
    %v493 = vpop.trf.xlu0
    %v494 = vpop.trf.xlu0
    %v495 = vpop.trf.xlu0
    %496 = vxpose.xlu0.b32.start [1/16] %v255, 128
    %497 = vxpose.xlu0.b32.cont [2/16] 0.0, 128
    %498 = vxpose.xlu0.b32.cont [3/16] 0.0, 128
    %499 = vxpose.xlu0.b32.cont [4/16] 0.0, 128
    %500 = vxpose.xlu0.b32.cont [5/16] 0.0, 128
    %501 = vxpose.xlu0.b32.cont [6/16] 0.0, 128
    %502 = vxpose.xlu0.b32.cont [7/16] 0.0, 128
    %503 = vxpose.xlu0.b32.cont [8/16] 0.0, 128
    %504 = vxpose.xlu0.b32.cont [9/16] 0.0, 128
    %505 = vxpose.xlu0.b32.cont [10/16] 0.0, 128
    %506 = vxpose.xlu0.b32.cont [11/16] 0.0, 128
    %507 = vxpose.xlu0.b32.cont [12/16] 0.0, 128
    %508 = vxpose.xlu0.b32.cont [13/16] 0.0, 128
    %509 = vxpose.xlu0.b32.cont [14/16] 0.0, 128
    %510 = vxpose.xlu0.b32.cont [15/16] 0.0, 128
    %511 = vxpose.xlu0.b32.end [16/16] 0.0, 128
    %v512 = vpop.trf.xlu0
    %v513 = vpop.trf.xlu0
    %v514 = vpop.trf.xlu0
    %v515 = vpop.trf.xlu0
    %v516 = vpop.trf.xlu0
    %v517 = vpop.trf.xlu0
    %v518 = vpop.trf.xlu0
    %v519 = vpop.trf.xlu0
    %v520 = vpop.trf.xlu0
    %v521 = vpop.trf.xlu0
    %v522 = vpop.trf.xlu0
    %v523 = vpop.trf.xlu0
    %v524 = vpop.trf.xlu0
    %v525 = vpop.trf.xlu0
    %v526 = vpop.trf.xlu0
    %v527 = vpop.trf.xlu0
    %v528 = vpack.c.bf16 %v481, %v480
    %v529 = vpack.c.bf16 %v483, %v482
    %v530 = vpack.c.bf16 %v513, %v512
    %v531 = vpack.c.bf16 %v515, %v514
    %v532 = vpack.c.bf16 %v358, %v358
    %v533 = vpack.c.bf16 %v359, %v359
    %vm534 = vcmask 64512
    %v536 = vsel %vm534, %v528, 0
    %v539 = vsel %vm534, %v529, 0
    %vm541 = vcmask 1043456
    %v543 = vsel %vm541, %v532, 0
    %545 = vmatprep.subr.bf16.mxu0 0
    %546 = vmatpush1.bf16.msra.mxu0 %v543
    %547 = vmatprep.subr.bf16.mxu0 0
    %548 = vmatpush1.bf16.msra.mxu0 0
    %549 = vmatprep.subr.bf16.mxu0 0
    %550 = vmatpush1.bf16.msra.mxu0 0
    %551 = vmatprep.subr.bf16.mxu0 0
    %552 = vmatpush1.bf16.msra.mxu0 0
    %553 = vmatprep.subr.bf16.mxu0 0
    %554 = vmatpush1.bf16.msra.mxu0 0
    %555 = vmatprep.subr.bf16.mxu0 0
    %556 = vmatpush1.bf16.msra.mxu0 0
    %557 = vmatprep.subr.bf16.mxu0 0
    %558 = vmatpush1.bf16.msra.mxu0 0
    %559 = vmatprep.subr.bf16.mxu0 0
    %560 = vmatpush1.bf16.msra.mxu0 0
    %561 = vmatprep.subr.bf16.mxu0 0
    %562 = vmatpush1.bf16.msra.mxu0 0
    %563 = vmatprep.subr.bf16.mxu0 0
    %564 = vmatpush1.bf16.msra.mxu0 0
    %565 = vmatprep.subr.bf16.mxu0 0
    %566 = vmatpush1.bf16.msra.mxu0 0
    %567 = vmatprep.subr.bf16.mxu0 0
    %568 = vmatpush1.bf16.msra.mxu0 0
    %569 = vmatprep.subr.bf16.mxu0 0
    %570 = vmatpush1.bf16.msra.mxu0 0
    %571 = vmatprep.subr.bf16.mxu0 0
    %572 = vmatpush1.bf16.msra.mxu0 0
    %573 = vmatprep.subr.bf16.mxu0 0
    %574 = vmatpush1.bf16.msra.mxu0 0
    %575 = vmatprep.subr.bf16.mxu0 0
    %576 = vmatpush1.bf16.msra.mxu0 0
    %577 = vmatprep.mubr.bf16.mxu0 0
    %578 = vmatmul.mubr.bf16.gmra.mrb[0].mxu0 %v536
    %v579 = vpop.f32.mrb[0].mxu0
    %v580 = vadd.f32 0.0, %v579
    %v581 = vpop.f32.mrb[0].mxu0
    %v582 = vpop.f32.mrb[0].mxu0
    %v583 = vadd.f32 0.0, %v582
    %v584 = vpop.f32.mrb[0].mxu0
    %585 = vmatprep.mubr.bf16.mxu0 0
    %586 = vmatmul.mubr.bf16.gmra.mrb[0].mxu0 %v539
    %v587 = vpop.f32.mrb[0].mxu0
    %v588 = vadd.f32 0.0, %v587
    %v589 = vpop.f32.mrb[0].mxu0
    %v590 = vpop.f32.mrb[0].mxu0
    %v591 = vadd.f32 0.0, %v590
    %v592 = vpop.f32.mrb[0].mxu0
    %593 = vdwg.mxu0
    %v595 = vsel %vm534, %v530, 0
    %v598 = vsel %vm534, %v531, 0
    %v601 = vsel %vm541, %v533, 0
    %603 = vmatprep.subr.bf16.mxu0 0
    %604 = vmatpush1.bf16.msra.mxu0 %v601
    %605 = vmatprep.subr.bf16.mxu0 0
    %606 = vmatpush1.bf16.msra.mxu0 0
    %607 = vmatprep.subr.bf16.mxu0 0
    %608 = vmatpush1.bf16.msra.mxu0 0
    %609 = vmatprep.subr.bf16.mxu0 0
    %610 = vmatpush1.bf16.msra.mxu0 0
    %611 = vmatprep.subr.bf16.mxu0 0
    %612 = vmatpush1.bf16.msra.mxu0 0
    %613 = vmatprep.subr.bf16.mxu0 0
    %614 = vmatpush1.bf16.msra.mxu0 0
    %615 = vmatprep.subr.bf16.mxu0 0
    %616 = vmatpush1.bf16.msra.mxu0 0
    %617 = vmatprep.subr.bf16.mxu0 0
    %618 = vmatpush1.bf16.msra.mxu0 0
    %619 = vmatprep.subr.bf16.mxu0 0
    %620 = vmatpush1.bf16.msra.mxu0 0
    %621 = vmatprep.subr.bf16.mxu0 0
    %622 = vmatpush1.bf16.msra.mxu0 0
    %623 = vmatprep.subr.bf16.mxu0 0
    %624 = vmatpush1.bf16.msra.mxu0 0
    %625 = vmatprep.subr.bf16.mxu0 0
    %626 = vmatpush1.bf16.msra.mxu0 0
    %627 = vmatprep.subr.bf16.mxu0 0
    %628 = vmatpush1.bf16.msra.mxu0 0
    %629 = vmatprep.subr.bf16.mxu0 0
    %630 = vmatpush1.bf16.msra.mxu0 0
    %631 = vmatprep.subr.bf16.mxu0 0
    %632 = vmatpush1.bf16.msra.mxu0 0
    %633 = vmatprep.subr.bf16.mxu0 0
    %634 = vmatpush1.bf16.msra.mxu0 0
    %635 = vmatprep.mubr.bf16.mxu0 0
    %636 = vmatmul.mubr.bf16.gmra.mrb[0].mxu0 %v595
    %v637 = vpop.f32.mrb[0].mxu0
    %v638 = vadd.f32 0.0, %v637
    %v639 = vpop.f32.mrb[0].mxu0
    %v640 = vpop.f32.mrb[0].mxu0
    %v641 = vadd.f32 0.0, %v640
    %v642 = vpop.f32.mrb[0].mxu0
    %643 = vmatprep.mubr.bf16.mxu0 0
    %644 = vmatmul.mubr.bf16.gmra.mrb[0].mxu0 %v598
    %v645 = vpop.f32.mrb[0].mxu0
    %v646 = vadd.f32 0.0, %v645
    %v647 = vpop.f32.mrb[0].mxu0
    %v648 = vpop.f32.mrb[0].mxu0
    %v649 = vadd.f32 0.0, %v648
    %v650 = vpop.f32.mrb[0].mxu0
    %651 = vdwg.mxu0
    %v652 = vsel %vm164, %v580, -inf
    %v653 = vsel %vm164, %v638, -inf
    %v654 = vmax.f32 %v652, %v653
    %v655 = vsel %vm164, %v583, -inf
    %v656 = vsel %vm164, %v641, -inf
    %v657 = vmax.f32 %v655, %v656
    %v658 = vsel %vm164, %v588, -inf
    %v659 = vsel %vm164, %v646, -inf
    %v660 = vmax.f32 %v658, %v659
    %v661 = vsel %vm164, %v591, -inf
    %v662 = vsel %vm164, %v649, -inf
    %v663 = vmax.f32 %v661, %v662
    %v664 = vsub.f32 %v580, %v654
    %v665 = vsub.f32 %v583, %v657
    %v666 = vsub.f32 %v588, %v660
    %v667 = vsub.f32 %v591, %v663
    %v668 = vsub.f32 %v638, %v654
    %v669 = vsub.f32 %v641, %v657
    %v670 = vsub.f32 %v646, %v660
    %v671 = vsub.f32 %v649, %v663
    %v672 = vmul.f32 %v664, 1.442695
    %v673 = vpow.pop %v672
    %v674 = vmul.f32 %v665, 1.442695
    %v675 = vpow.pop %v674
    %v676 = vmul.f32 %v666, 1.442695
    %v677 = vpow.pop %v676
    %v678 = vmul.f32 %v667, 1.442695
    %v679 = vpow.pop %v678
    %v680 = vmul.f32 %v668, 1.442695
    %v681 = vpow.pop %v680
    %v682 = vmul.f32 %v669, 1.442695
    %v683 = vpow.pop %v682
    %v684 = vmul.f32 %v670, 1.442695
    %v685 = vpow.pop %v684
    %v686 = vmul.f32 %v671, 1.442695
    %v687 = vpow.pop %v686
    %v688 = vsel %vm164, %v673, 0.0
    %v689 = vsel %vm164, %v681, 0.0
    %v690 = vadd.f32 %v688, %v689
    %v691 = vsel %vm164, %v675, 0.0
    %v692 = vsel %vm164, %v683, 0.0
    %v693 = vadd.f32 %v691, %v692
    %v694 = vsel %vm164, %v677, 0.0
    %v695 = vsel %vm164, %v685, 0.0
    %v696 = vadd.f32 %v694, %v695
    %v697 = vsel %vm164, %v679, 0.0
    %v698 = vsel %vm164, %v687, 0.0
    %v699 = vadd.f32 %v697, %v698
    %v700 = vrcp.pop %v690
    %v701 = vrcp.pop %v693
    %v702 = vrcp.pop %v696
    %v703 = vrcp.pop %v699
    %v704 = vmul.f32 %v673, %v700
    %v705 = vmul.f32 %v675, %v701
    %v706 = vmul.f32 %v677, %v702
    %v707 = vmul.f32 %v679, %v703
    %v708 = vmul.f32 %v681, %v700
    %v709 = vmul.f32 %v683, %v701
    %v710 = vmul.f32 %v685, %v702
    %v711 = vmul.f32 %v687, %v703
    %v712 = vpack.c.bf16 %v462, %v462
    %v713 = vpack.c.bf16 %v463, %v463
    %v714 = vpack.c.bf16 %v705, %v704
    %v715 = vpack.c.bf16 %v707, %v706
    %v716 = vpack.c.bf16 %v709, %v708
    %v717 = vpack.c.bf16 %v711, %v710
    %v719 = vsel %vm164, %v712, 0
    %v722 = vsel %vm164, %v714, 0
    %v725 = vsel %vm164, %v715, 0
    %727 = vmatprep.subr.bf16.mxu0 0
    %728 = vmatpush1.bf16.xpose.msra.mxu0 %v722
    %729 = vmatprep.subr.bf16.mxu0 0
    %730 = vmatpush1.bf16.xpose.msra.mxu0 %v725
    %731 = vmatprep.subr.bf16.mxu0 0
    %732 = vmatpush1.bf16.xpose.msra.mxu0 0
    %733 = vmatprep.subr.bf16.mxu0 0
    %734 = vmatpush1.bf16.xpose.msra.mxu0 0
    %735 = vmatprep.subr.bf16.mxu0 0
    %736 = vmatpush1.bf16.xpose.msra.mxu0 0
    %737 = vmatprep.subr.bf16.mxu0 0
    %738 = vmatpush1.bf16.xpose.msra.mxu0 0
    %739 = vmatprep.subr.bf16.mxu0 0
    %740 = vmatpush1.bf16.xpose.msra.mxu0 0
    %741 = vmatprep.subr.bf16.mxu0 0
    %742 = vmatpush1.bf16.xpose.msra.mxu0 0
    %743 = vmatprep.subr.bf16.mxu0 0
    %744 = vmatpush1.bf16.xpose.msra.mxu0 0
    %745 = vmatprep.subr.bf16.mxu0 0
    %746 = vmatpush1.bf16.xpose.msra.mxu0 0
    %747 = vmatprep.subr.bf16.mxu0 0
    %748 = vmatpush1.bf16.xpose.msra.mxu0 0
    %749 = vmatprep.subr.bf16.mxu0 0
    %750 = vmatpush1.bf16.xpose.msra.mxu0 0
    %751 = vmatprep.subr.bf16.mxu0 0
    %752 = vmatpush1.bf16.xpose.msra.mxu0 0
    %753 = vmatprep.subr.bf16.mxu0 0
    %754 = vmatpush1.bf16.xpose.msra.mxu0 0
    %755 = vmatprep.subr.bf16.mxu0 0
    %756 = vmatpush1.bf16.xpose.msra.mxu0 0
    %757 = vmatprep.subr.bf16.mxu0 0
    %758 = vmatpush1.bf16.xpose.msra.mxu0 0
    %759 = vmatprep.mubr.bf16.mxu0 0
    %760 = vmatmul.mubr.bf16.gmra.mrb[0].mxu0 %v719
    %v761 = vpop.f32.mrb[0].mxu0
    %v762 = vadd.f32 0.0, %v761
    %v763 = vpop.f32.mrb[0].mxu0
    %v764 = vpop.f32.mrb[0].mxu0
    %v765 = vpop.f32.mrb[0].mxu0
    %766 = vdwg.mxu0
    %v768 = vsel %vm164, %v713, 0
    %v771 = vsel %vm164, %v716, 0
    %v774 = vsel %vm164, %v717, 0
    %776 = vmatprep.subr.bf16.mxu0 0
    %777 = vmatpush1.bf16.xpose.msra.mxu0 %v771
    %778 = vmatprep.subr.bf16.mxu0 0
    %779 = vmatpush1.bf16.xpose.msra.mxu0 %v774
    %780 = vmatprep.subr.bf16.mxu0 0
    %781 = vmatpush1.bf16.xpose.msra.mxu0 0
    %782 = vmatprep.subr.bf16.mxu0 0
    %783 = vmatpush1.bf16.xpose.msra.mxu0 0
    %784 = vmatprep.subr.bf16.mxu0 0
    %785 = vmatpush1.bf16.xpose.msra.mxu0 0
    %786 = vmatprep.subr.bf16.mxu0 0
    %787 = vmatpush1.bf16.xpose.msra.mxu0 0
    %788 = vmatprep.subr.bf16.mxu0 0
    %789 = vmatpush1.bf16.xpose.msra.mxu0 0
    %790 = vmatprep.subr.bf16.mxu0 0
    %791 = vmatpush1.bf16.xpose.msra.mxu0 0
    %792 = vmatprep.subr.bf16.mxu0 0
    %793 = vmatpush1.bf16.xpose.msra.mxu0 0
    %794 = vmatprep.subr.bf16.mxu0 0
    %795 = vmatpush1.bf16.xpose.msra.mxu0 0
    %796 = vmatprep.subr.bf16.mxu0 0
    %797 = vmatpush1.bf16.xpose.msra.mxu0 0
    %798 = vmatprep.subr.bf16.mxu0 0
    %799 = vmatpush1.bf16.xpose.msra.mxu0 0
    %800 = vmatprep.subr.bf16.mxu0 0
    %801 = vmatpush1.bf16.xpose.msra.mxu0 0
    %802 = vmatprep.subr.bf16.mxu0 0
    %803 = vmatpush1.bf16.xpose.msra.mxu0 0
    %804 = vmatprep.subr.bf16.mxu0 0
    %805 = vmatpush1.bf16.xpose.msra.mxu0 0
    %806 = vmatprep.subr.bf16.mxu0 0
    %807 = vmatpush1.bf16.xpose.msra.mxu0 0
    %808 = vmatprep.mubr.bf16.mxu0 0
    %809 = vmatmul.mubr.bf16.gmra.mrb[0].mxu0 %v768
    %v810 = vpop.f32.mrb[0].mxu0
    %v811 = vadd.f32 0.0, %v810
    %v812 = vpop.f32.mrb[0].mxu0
    %v813 = vpop.f32.mrb[0].mxu0
    %v814 = vpop.f32.mrb[0].mxu0
    %815 = vdwg.mxu0
    %v816 = vpack.c.bf16 %v811, %v762
    %v817 = vld [vmem:[%s10] sm:$0xf]
    %v818 = vld [vmem:[%s10 + $0x4] sm:$0xf]
    %v819 = vld [vmem:[%s10 + $0x8] sm:$0xf]
    %v820 = vld [vmem:[%s10 + $0xc] sm:$0xf]
    %v825 = vunpack.c.l.b16 %v817
    %v826 = vunpack.c.l.b16 %v818
    %v827 = vunpack.c.l.b16 %v819
    %v828 = vunpack.c.l.b16 %v820
    %v829 = vpack.c.b16 %v826, %v825
    %v830 = vpack.c.b16 %v828, %v827
    %v834 = vsel %vm164, %v816, 0
    %836 = vmatprep.subr.bf16.mxu0 0
    %837 = vmatpush1.bf16.msra.mxu0 %v829
    %838 = vmatprep.subr.bf16.mxu0 0
    %839 = vmatpush1.bf16.msra.mxu0 %v830
    %840 = vmatprep.subr.bf16.mxu0 0
    %841 = vmatpush1.bf16.msra.mxu0 0
    %842 = vmatprep.subr.bf16.mxu0 0
    %843 = vmatpush1.bf16.msra.mxu0 0
    %844 = vmatprep.subr.bf16.mxu0 0
    %845 = vmatpush1.bf16.msra.mxu0 0
    %846 = vmatprep.subr.bf16.mxu0 0
    %847 = vmatpush1.bf16.msra.mxu0 0
    %848 = vmatprep.subr.bf16.mxu0 0
    %849 = vmatpush1.bf16.msra.mxu0 0
    %850 = vmatprep.subr.bf16.mxu0 0
    %851 = vmatpush1.bf16.msra.mxu0 0
    %852 = vmatprep.subr.bf16.mxu0 0
    %853 = vmatpush1.bf16.msra.mxu0 0
    %854 = vmatprep.subr.bf16.mxu0 0
    %855 = vmatpush1.bf16.msra.mxu0 0
    %856 = vmatprep.subr.bf16.mxu0 0
    %857 = vmatpush1.bf16.msra.mxu0 0
    %858 = vmatprep.subr.bf16.mxu0 0
    %859 = vmatpush1.bf16.msra.mxu0 0
    %860 = vmatprep.subr.bf16.mxu0 0
    %861 = vmatpush1.bf16.msra.mxu0 0
    %862 = vmatprep.subr.bf16.mxu0 0
    %863 = vmatpush1.bf16.msra.mxu0 0
    %864 = vmatprep.subr.bf16.mxu0 0
    %865 = vmatpush1.bf16.msra.mxu0 0
    %866 = vmatprep.subr.bf16.mxu0 0
    %867 = vmatpush1.bf16.msra.mxu0 0
    %868 = vmatprep.mubr.bf16.mxu0 0
    %869 = vmatmul.mubr.bf16.gmra.mrb[0].mxu0 %v834
    %v870 = vpop.f32.mrb[0].mxu0
    %v871 = vadd.f32 0.0, %v870
    %v872 = vpop.f32.mrb[0].mxu0
    %v873 = vpop.f32.mrb[0].mxu0
    %v874 = vadd.f32 0.0, %v873
    %v875 = vpop.f32.mrb[0].mxu0
    %876 = vdwg.mxu0
    %v877 = vsel %vm164, %v871, 0.0
    %v878 = vsel %vm164, %v874, 0.0
    %v879 = vadd.f32 %v877, %v878
    %v880 = vrot.slane %v879, 4
    %v881 = vadd.f32 %v879, %v880
    %v882 = vrot.slane %v881, 2
    %v883 = vadd.f32 %v881, %v882
    %v884 = vrot.slane %v883, 1
    %v885 = vadd.f32 %v883, %v884
    %v886 = vmul.f32 %v885, 0.0625
    %v887 = vsub.f32 %v871, %v886
    %v888 = vsub.f32 %v874, %v886
    %v889 = vmul.f32 %v887, %v887
    %v890 = vmul.f32 %v888, %v888
    %v891 = vsel %vm164, %v889, 0.0
    %v892 = vsel %vm164, %v890, 0.0
    %v893 = vadd.f32 %v891, %v892
    %v894 = vrot.slane %v893, 4
    %v895 = vadd.f32 %v893, %v894
    %v896 = vrot.slane %v895, 2
    %v897 = vadd.f32 %v895, %v896
    %v898 = vrot.slane %v897, 1
    %v899 = vadd.f32 %v897, %v898
    %v900 = vmul.f32 %v899, 0.0625
    %v901 = vld [vmem:[%s11] sm:$0x1]
    %v902 = vadd.f32 %v900, 1e-05
    %v903 = vrsqrt.pop %v902
    %v904 = vmul.f32 %v901, %v903
    %v906 = vlaneseq
    %v907 = vshrl.u32 %v906, 7
    %v908 = vsub.s32 0, %v907
    %v909 = vrot.slane %v904, %v908
    %v911 = vmul.f32 %v887, %v909
    %v912 = vmul.f32 %v888, %v909
    %v913 = vld [vmem:[%s12] sm:$0x1]
    %v915 = vlaneseq
    %v916 = vshrl.u32 %v915, 7
    %v917 = vsub.s32 0, %v916
    %v918 = vrot.slane %v913, %v917
    %v920 = vadd.f32 %v911, %v918
    %v921 = vadd.f32 %v912, %v918
    %v922 = vmax.f32 %v920, 0.0
    %v923 = vmax.f32 %v921, 0.0
    %v924 = vld [vmem:[%s13] sm:$0xf]
    %v925 = vld [vmem:[%s13 + $0x4] sm:$0xf]
    %v926 = vld [vmem:[%s13 + $0x8] sm:$0xf]
    %v927 = vld [vmem:[%s13 + $0xc] sm:$0xf]
    %v932 = vunpack.c.l.b16 %v924
    %v933 = vunpack.c.l.b16 %v925
    %v934 = vunpack.c.l.b16 %v926
    %v935 = vunpack.c.l.b16 %v927
    %v936 = vpack.c.b16 %v933, %v932
    %v937 = vpack.c.b16 %v935, %v934
    %940 = vmatprep.subr.bf16.mxu0 0
    %941 = vmatpush1.bf16.msra.mxu0 %v936
    %942 = vmatprep.subr.bf16.mxu0 0
    %943 = vmatpush1.bf16.msra.mxu0 %v937
    %944 = vmatprep.subr.bf16.mxu0 0
    %945 = vmatpush1.bf16.msra.mxu0 0
    %946 = vmatprep.subr.bf16.mxu0 0
    %947 = vmatpush1.bf16.msra.mxu0 0
    %948 = vmatprep.subr.bf16.mxu0 0
    %949 = vmatpush1.bf16.msra.mxu0 0
    %950 = vmatprep.subr.bf16.mxu0 0
    %951 = vmatpush1.bf16.msra.mxu0 0
    %952 = vmatprep.subr.bf16.mxu0 0
    %953 = vmatpush1.bf16.msra.mxu0 0
    %954 = vmatprep.subr.bf16.mxu0 0
    %955 = vmatpush1.bf16.msra.mxu0 0
    %956 = vmatprep.subr.bf16.mxu0 0
    %957 = vmatpush1.bf16.msra.mxu0 0
    %958 = vmatprep.subr.bf16.mxu0 0
    %959 = vmatpush1.bf16.msra.mxu0 0
    %960 = vmatprep.subr.bf16.mxu0 0
    %961 = vmatpush1.bf16.msra.mxu0 0
    %962 = vmatprep.subr.bf16.mxu0 0
    %963 = vmatpush1.bf16.msra.mxu0 0
    %964 = vmatprep.subr.bf16.mxu0 0
    %965 = vmatpush1.bf16.msra.mxu0 0
    %966 = vmatprep.subr.bf16.mxu0 0
    %967 = vmatpush1.bf16.msra.mxu0 0
    %968 = vmatprep.subr.bf16.mxu0 0
    %969 = vmatpush1.bf16.msra.mxu0 0
    %970 = vmatprep.subr.bf16.mxu0 0
    %971 = vmatpush1.bf16.msra.mxu0 0
    %972 = vmatprep.mubr.bf16.mxu0 0
    %973 = vmatmul.mubr.bf16.gmra.mrb[0].mxu0 %v834
    %v974 = vpop.f32.mrb[0].mxu0
    %v975 = vadd.f32 0.0, %v974
    %v976 = vpop.f32.mrb[0].mxu0
    %v977 = vpop.f32.mrb[0].mxu0
    %v978 = vadd.f32 0.0, %v977
    %v979 = vpop.f32.mrb[0].mxu0
    %980 = vdwg.mxu0
    %v981 = vsel %vm164, %v975, 0.0
    %v982 = vsel %vm164, %v978, 0.0
    %v983 = vadd.f32 %v981, %v982
    %v984 = vrot.slane %v983, 4
    %v985 = vadd.f32 %v983, %v984
    %v986 = vrot.slane %v985, 2
    %v987 = vadd.f32 %v985, %v986
    %v988 = vrot.slane %v987, 1
    %v989 = vadd.f32 %v987, %v988
    %v990 = vmul.f32 %v989, 0.0625
    %v991 = vsub.f32 %v975, %v990
    %v992 = vsub.f32 %v978, %v990
    %v993 = vmul.f32 %v991, %v991
    %v994 = vmul.f32 %v992, %v992
    %v995 = vsel %vm164, %v993, 0.0
    %v996 = vsel %vm164, %v994, 0.0
    %v997 = vadd.f32 %v995, %v996
    %v998 = vrot.slane %v997, 4
    %v999 = vadd.f32 %v997, %v998
    %v1000 = vrot.slane %v999, 2
    %v1001 = vadd.f32 %v999, %v1000
    %v1002 = vrot.slane %v1001, 1
    %v1003 = vadd.f32 %v1001, %v1002
    %v1004 = vmul.f32 %v1003, 0.0625
    %v1005 = vld [vmem:[%s14] sm:$0x1]
    %v1006 = vadd.f32 %v1004, 1e-05
    %v1007 = vrsqrt.pop %v1006
    %v1008 = vmul.f32 %v1005, %v1007
    %v1010 = vlaneseq
    %v1011 = vshrl.u32 %v1010, 7
    %v1012 = vsub.s32 0, %v1011
    %v1013 = vrot.slane %v1008, %v1012
    %v1015 = vmul.f32 %v991, %v1013
    %v1016 = vmul.f32 %v992, %v1013
    %v1017 = vld [vmem:[%s15] sm:$0x1]
    %v1019 = vlaneseq
    %v1020 = vshrl.u32 %v1019, 7
    %v1021 = vsub.s32 0, %v1020
    %v1022 = vrot.slane %v1017, %v1021
    %v1024 = vadd.f32 %v1015, %v1022
    %v1025 = vadd.f32 %v1016, %v1022
    %v1026 = vmax.f32 %v1024, 0.0
    %v1027 = vmax.f32 %v1025, 0.0
    %v1028 = vld [vmem:[%s16] sm:$0xf]
    %v1029 = vld [vmem:[%s16 + $0x4] sm:$0xf]
    %v1030 = vld [vmem:[%s16 + $0x8] sm:$0xf]
    %v1031 = vld [vmem:[%s16 + $0xc] sm:$0xf]
    %v1036 = vunpack.c.l.b16 %v1028
    %v1037 = vunpack.c.l.b16 %v1029
    %v1038 = vunpack.c.l.b16 %v1030
    %v1039 = vunpack.c.l.b16 %v1031
    %v1040 = vpack.c.b16 %v1037, %v1036
    %v1041 = vpack.c.b16 %v1039, %v1038
    %1044 = vmatprep.subr.bf16.mxu0 0
    %1045 = vmatpush1.bf16.msra.mxu0 %v1040
    %1046 = vmatprep.subr.bf16.mxu0 0
    %1047 = vmatpush1.bf16.msra.mxu0 %v1041
    %1048 = vmatprep.subr.bf16.mxu0 0
    %1049 = vmatpush1.bf16.msra.mxu0 0
    %1050 = vmatprep.subr.bf16.mxu0 0
    %1051 = vmatpush1.bf16.msra.mxu0 0
    %1052 = vmatprep.subr.bf16.mxu0 0
    %1053 = vmatpush1.bf16.msra.mxu0 0
    %1054 = vmatprep.subr.bf16.mxu0 0
    %1055 = vmatpush1.bf16.msra.mxu0 0
    %1056 = vmatprep.subr.bf16.mxu0 0
    %1057 = vmatpush1.bf16.msra.mxu0 0
    %1058 = vmatprep.subr.bf16.mxu0 0
    %1059 = vmatpush1.bf16.msra.mxu0 0
    %1060 = vmatprep.subr.bf16.mxu0 0
    %1061 = vmatpush1.bf16.msra.mxu0 0
    %1062 = vmatprep.subr.bf16.mxu0 0
    %1063 = vmatpush1.bf16.msra.mxu0 0
    %1064 = vmatprep.subr.bf16.mxu0 0
    %1065 = vmatpush1.bf16.msra.mxu0 0
    %1066 = vmatprep.subr.bf16.mxu0 0
    %1067 = vmatpush1.bf16.msra.mxu0 0
    %1068 = vmatprep.subr.bf16.mxu0 0
    %1069 = vmatpush1.bf16.msra.mxu0 0
    %1070 = vmatprep.subr.bf16.mxu0 0
    %1071 = vmatpush1.bf16.msra.mxu0 0
    %1072 = vmatprep.subr.bf16.mxu0 0
    %1073 = vmatpush1.bf16.msra.mxu0 0
    %1074 = vmatprep.subr.bf16.mxu0 0
    %1075 = vmatpush1.bf16.msra.mxu0 0
    %1076 = vmatprep.mubr.bf16.mxu0 0
    %1077 = vmatmul.mubr.bf16.gmra.mrb[0].mxu0 %v834
    %v1078 = vpop.f32.mrb[0].mxu0
    %v1079 = vadd.f32 0.0, %v1078
    %v1080 = vpop.f32.mrb[0].mxu0
    %v1081 = vpop.f32.mrb[0].mxu0
    %v1082 = vadd.f32 0.0, %v1081
    %v1083 = vpop.f32.mrb[0].mxu0
    %1084 = vdwg.mxu0
    %v1085 = vsel %vm164, %v1079, 0.0
    %v1086 = vsel %vm164, %v1082, 0.0
    %v1087 = vadd.f32 %v1085, %v1086
    %v1088 = vrot.slane %v1087, 4
    %v1089 = vadd.f32 %v1087, %v1088
    %v1090 = vrot.slane %v1089, 2
    %v1091 = vadd.f32 %v1089, %v1090
    %v1092 = vrot.slane %v1091, 1
    %v1093 = vadd.f32 %v1091, %v1092
    %v1094 = vmul.f32 %v1093, 0.0625
    %v1095 = vsub.f32 %v1079, %v1094
    %v1096 = vsub.f32 %v1082, %v1094
    %v1097 = vmul.f32 %v1095, %v1095
    %v1098 = vmul.f32 %v1096, %v1096
    %v1099 = vsel %vm164, %v1097, 0.0
    %v1100 = vsel %vm164, %v1098, 0.0
    %v1101 = vadd.f32 %v1099, %v1100
    %v1102 = vrot.slane %v1101, 4
    %v1103 = vadd.f32 %v1101, %v1102
    %v1104 = vrot.slane %v1103, 2
    %v1105 = vadd.f32 %v1103, %v1104
    %v1106 = vrot.slane %v1105, 1
    %v1107 = vadd.f32 %v1105, %v1106
    %v1108 = vmul.f32 %v1107, 0.0625
    %v1109 = vld [vmem:[%s17] sm:$0x1]
    %v1110 = vadd.f32 %v1108, 1e-05
    %v1111 = vrsqrt.pop %v1110
    %v1112 = vmul.f32 %v1109, %v1111
    %v1114 = vlaneseq
    %v1115 = vshrl.u32 %v1114, 7
    %v1116 = vsub.s32 0, %v1115
    %v1117 = vrot.slane %v1112, %v1116
    %v1119 = vmul.f32 %v1095, %v1117
    %v1120 = vmul.f32 %v1096, %v1117
    %v1121 = vld [vmem:[%s18] sm:$0x1]
    %v1123 = vlaneseq
    %v1124 = vshrl.u32 %v1123, 7
    %v1125 = vsub.s32 0, %v1124
    %v1126 = vrot.slane %v1121, %v1125
    %v1128 = vadd.f32 %v1119, %v1126
    %v1129 = vadd.f32 %v1120, %v1126
    %v1130 = vmax.f32 %v1128, 0.0
    %v1131 = vmax.f32 %v1129, 0.0
    %1132 = vxpose.xlu0.b32.start [1/16] %v922, 128
    %1133 = vxpose.xlu0.b32.cont [2/16] 0.0, 128
    %1134 = vxpose.xlu0.b32.cont [3/16] 0.0, 128
    %1135 = vxpose.xlu0.b32.cont [4/16] 0.0, 128
    %1136 = vxpose.xlu0.b32.cont [5/16] 0.0, 128
    %1137 = vxpose.xlu0.b32.cont [6/16] 0.0, 128
    %1138 = vxpose.xlu0.b32.cont [7/16] 0.0, 128
    %1139 = vxpose.xlu0.b32.cont [8/16] 0.0, 128
    %1140 = vxpose.xlu0.b32.cont [9/16] 0.0, 128
    %1141 = vxpose.xlu0.b32.cont [10/16] 0.0, 128
    %1142 = vxpose.xlu0.b32.cont [11/16] 0.0, 128
    %1143 = vxpose.xlu0.b32.cont [12/16] 0.0, 128
    %1144 = vxpose.xlu0.b32.cont [13/16] 0.0, 128
    %1145 = vxpose.xlu0.b32.cont [14/16] 0.0, 128
    %1146 = vxpose.xlu0.b32.cont [15/16] 0.0, 128
    %1147 = vxpose.xlu0.b32.end [16/16] 0.0, 128
    %v1148 = vpop.trf.xlu0
    %v1149 = vpop.trf.xlu0
    %v1150 = vpop.trf.xlu0
    %v1151 = vpop.trf.xlu0
    %v1152 = vpop.trf.xlu0
    %v1153 = vpop.trf.xlu0
    %v1154 = vpop.trf.xlu0
    %v1155 = vpop.trf.xlu0
    %v1156 = vpop.trf.xlu0
    %v1157 = vpop.trf.xlu0
    %v1158 = vpop.trf.xlu0
    %v1159 = vpop.trf.xlu0
    %v1160 = vpop.trf.xlu0
    %v1161 = vpop.trf.xlu0
    %v1162 = vpop.trf.xlu0
    %v1163 = vpop.trf.xlu0
    %1164 = vxpose.xlu0.b32.start [1/16] %v923, 128
    %1165 = vxpose.xlu0.b32.cont [2/16] 0.0, 128
    %1166 = vxpose.xlu0.b32.cont [3/16] 0.0, 128
    %1167 = vxpose.xlu0.b32.cont [4/16] 0.0, 128
    %1168 = vxpose.xlu0.b32.cont [5/16] 0.0, 128
    %1169 = vxpose.xlu0.b32.cont [6/16] 0.0, 128
    %1170 = vxpose.xlu0.b32.cont [7/16] 0.0, 128
    %1171 = vxpose.xlu0.b32.cont [8/16] 0.0, 128
    %1172 = vxpose.xlu0.b32.cont [9/16] 0.0, 128
    %1173 = vxpose.xlu0.b32.cont [10/16] 0.0, 128
    %1174 = vxpose.xlu0.b32.cont [11/16] 0.0, 128
    %1175 = vxpose.xlu0.b32.cont [12/16] 0.0, 128
    %1176 = vxpose.xlu0.b32.cont [13/16] 0.0, 128
    %1177 = vxpose.xlu0.b32.cont [14/16] 0.0, 128
    %1178 = vxpose.xlu0.b32.cont [15/16] 0.0, 128
    %1179 = vxpose.xlu0.b32.end [16/16] 0.0, 128
    %v1180 = vpop.trf.xlu0
    %v1181 = vpop.trf.xlu0
    %v1182 = vpop.trf.xlu0
    %v1183 = vpop.trf.xlu0
    %v1184 = vpop.trf.xlu0
    %v1185 = vpop.trf.xlu0
    %v1186 = vpop.trf.xlu0
    %v1187 = vpop.trf.xlu0
    %v1188 = vpop.trf.xlu0
    %v1189 = vpop.trf.xlu0
    %v1190 = vpop.trf.xlu0
    %v1191 = vpop.trf.xlu0
    %v1192 = vpop.trf.xlu0
    %v1193 = vpop.trf.xlu0
    %v1194 = vpop.trf.xlu0
    %v1195 = vpop.trf.xlu0
    %v1196 = vpack.c.bf16 %v1149, %v1148
    %v1197 = vpack.c.bf16 %v1151, %v1150
    %v1198 = vpack.c.bf16 %v1181, %v1180
    %v1199 = vpack.c.bf16 %v1183, %v1182
    %v1200 = vpack.c.bf16 %v1026, %v1026
    %v1201 = vpack.c.bf16 %v1027, %v1027
    %v1203 = vsel %vm534, %v1196, 0
    %v1206 = vsel %vm534, %v1197, 0
    %v1209 = vsel %vm541, %v1200, 0
    %1211 = vmatprep.subr.bf16.mxu0 0
    %1212 = vmatpush1.bf16.msra.mxu0 %v1209
    %1213 = vmatprep.subr.bf16.mxu0 0
    %1214 = vmatpush1.bf16.msra.mxu0 0
    %1215 = vmatprep.subr.bf16.mxu0 0
    %1216 = vmatpush1.bf16.msra.mxu0 0
    %1217 = vmatprep.subr.bf16.mxu0 0
    %1218 = vmatpush1.bf16.msra.mxu0 0
    %1219 = vmatprep.subr.bf16.mxu0 0
    %1220 = vmatpush1.bf16.msra.mxu0 0
    %1221 = vmatprep.subr.bf16.mxu0 0
    %1222 = vmatpush1.bf16.msra.mxu0 0
    %1223 = vmatprep.subr.bf16.mxu0 0
    %1224 = vmatpush1.bf16.msra.mxu0 0
    %1225 = vmatprep.subr.bf16.mxu0 0
    %1226 = vmatpush1.bf16.msra.mxu0 0
    %1227 = vmatprep.subr.bf16.mxu0 0
    %1228 = vmatpush1.bf16.msra.mxu0 0
    %1229 = vmatprep.subr.bf16.mxu0 0
    %1230 = vmatpush1.bf16.msra.mxu0 0
    %1231 = vmatprep.subr.bf16.mxu0 0
    %1232 = vmatpush1.bf16.msra.mxu0 0
    %1233 = vmatprep.subr.bf16.mxu0 0
    %1234 = vmatpush1.bf16.msra.mxu0 0
    %1235 = vmatprep.subr.bf16.mxu0 0
    %1236 = vmatpush1.bf16.msra.mxu0 0
    %1237 = vmatprep.subr.bf16.mxu0 0
    %1238 = vmatpush1.bf16.msra.mxu0 0
    %1239 = vmatprep.subr.bf16.mxu0 0
    %1240 = vmatpush1.bf16.msra.mxu0 0
    %1241 = vmatprep.subr.bf16.mxu0 0
    %1242 = vmatpush1.bf16.msra.mxu0 0
    %1243 = vmatprep.mubr.bf16.mxu0 0
    %1244 = vmatmul.mubr.bf16.gmra.mrb[0].mxu0 %v1203
    %v1245 = vpop.f32.mrb[0].mxu0
    %v1246 = vadd.f32 0.0, %v1245
    %v1247 = vpop.f32.mrb[0].mxu0
    %v1248 = vpop.f32.mrb[0].mxu0
    %v1249 = vadd.f32 0.0, %v1248
    %v1250 = vpop.f32.mrb[0].mxu0
    %1251 = vmatprep.mubr.bf16.mxu0 0
    %1252 = vmatmul.mubr.bf16.gmra.mrb[0].mxu0 %v1206
    %v1253 = vpop.f32.mrb[0].mxu0
    %v1254 = vadd.f32 0.0, %v1253
    %v1255 = vpop.f32.mrb[0].mxu0
    %v1256 = vpop.f32.mrb[0].mxu0
    %v1257 = vadd.f32 0.0, %v1256
    %v1258 = vpop.f32.mrb[0].mxu0
    %1259 = vdwg.mxu0
    %v1261 = vsel %vm534, %v1198, 0
    %v1264 = vsel %vm534, %v1199, 0
    %v1267 = vsel %vm541, %v1201, 0
    %1269 = vmatprep.subr.bf16.mxu0 0
    %1270 = vmatpush1.bf16.msra.mxu0 %v1267
    %1271 = vmatprep.subr.bf16.mxu0 0
    %1272 = vmatpush1.bf16.msra.mxu0 0
    %1273 = vmatprep.subr.bf16.mxu0 0
    %1274 = vmatpush1.bf16.msra.mxu0 0
    %1275 = vmatprep.subr.bf16.mxu0 0
    %1276 = vmatpush1.bf16.msra.mxu0 0
    %1277 = vmatprep.subr.bf16.mxu0 0
    %1278 = vmatpush1.bf16.msra.mxu0 0
    %1279 = vmatprep.subr.bf16.mxu0 0
    %1280 = vmatpush1.bf16.msra.mxu0 0
    %1281 = vmatprep.subr.bf16.mxu0 0
    %1282 = vmatpush1.bf16.msra.mxu0 0
    %1283 = vmatprep.subr.bf16.mxu0 0
    %1284 = vmatpush1.bf16.msra.mxu0 0
    %1285 = vmatprep.subr.bf16.mxu0 0
    %1286 = vmatpush1.bf16.msra.mxu0 0
    %1287 = vmatprep.subr.bf16.mxu0 0
    %1288 = vmatpush1.bf16.msra.mxu0 0
    %1289 = vmatprep.subr.bf16.mxu0 0
    %1290 = vmatpush1.bf16.msra.mxu0 0
    %1291 = vmatprep.subr.bf16.mxu0 0
    %1292 = vmatpush1.bf16.msra.mxu0 0
    %1293 = vmatprep.subr.bf16.mxu0 0
    %1294 = vmatpush1.bf16.msra.mxu0 0
    %1295 = vmatprep.subr.bf16.mxu0 0
    %1296 = vmatpush1.bf16.msra.mxu0 0
    %1297 = vmatprep.subr.bf16.mxu0 0
    %1298 = vmatpush1.bf16.msra.mxu0 0
    %1299 = vmatprep.subr.bf16.mxu0 0
    %1300 = vmatpush1.bf16.msra.mxu0 0
    %1301 = vmatprep.mubr.bf16.mxu0 0
    %1302 = vmatmul.mubr.bf16.gmra.mrb[0].mxu0 %v1261
    %v1303 = vpop.f32.mrb[0].mxu0
    %v1304 = vadd.f32 0.0, %v1303
    %v1305 = vpop.f32.mrb[0].mxu0
    %v1306 = vpop.f32.mrb[0].mxu0
    %v1307 = vadd.f32 0.0, %v1306
    %v1308 = vpop.f32.mrb[0].mxu0
    %1309 = vmatprep.mubr.bf16.mxu0 0
    %1310 = vmatmul.mubr.bf16.gmra.mrb[0].mxu0 %v1264
    %v1311 = vpop.f32.mrb[0].mxu0
    %v1312 = vadd.f32 0.0, %v1311
    %v1313 = vpop.f32.mrb[0].mxu0
    %v1314 = vpop.f32.mrb[0].mxu0
    %v1315 = vadd.f32 0.0, %v1314
    %v1316 = vpop.f32.mrb[0].mxu0
    %1317 = vdwg.mxu0
    %v1318 = vsel %vm164, %v1246, -inf
    %v1319 = vsel %vm164, %v1304, -inf
    %v1320 = vmax.f32 %v1318, %v1319
    %v1321 = vsel %vm164, %v1249, -inf
    %v1322 = vsel %vm164, %v1307, -inf
    %v1323 = vmax.f32 %v1321, %v1322
    %v1324 = vsel %vm164, %v1254, -inf
    %v1325 = vsel %vm164, %v1312, -inf
    %v1326 = vmax.f32 %v1324, %v1325
    %v1327 = vsel %vm164, %v1257, -inf
    %v1328 = vsel %vm164, %v1315, -inf
    %v1329 = vmax.f32 %v1327, %v1328
    %v1330 = vsub.f32 %v1246, %v1320
    %v1331 = vsub.f32 %v1249, %v1323
    %v1332 = vsub.f32 %v1254, %v1326
    %v1333 = vsub.f32 %v1257, %v1329
    %v1334 = vsub.f32 %v1304, %v1320
    %v1335 = vsub.f32 %v1307, %v1323
    %v1336 = vsub.f32 %v1312, %v1326
    %v1337 = vsub.f32 %v1315, %v1329
    %v1338 = vmul.f32 %v1330, 1.442695
    %v1339 = vpow.pop %v1338
    %v1340 = vmul.f32 %v1331, 1.442695
    %v1341 = vpow.pop %v1340
    %v1342 = vmul.f32 %v1332, 1.442695
    %v1343 = vpow.pop %v1342
    %v1344 = vmul.f32 %v1333, 1.442695
    %v1345 = vpow.pop %v1344
    %v1346 = vmul.f32 %v1334, 1.442695
    %v1347 = vpow.pop %v1346
    %v1348 = vmul.f32 %v1335, 1.442695
    %v1349 = vpow.pop %v1348
    %v1350 = vmul.f32 %v1336, 1.442695
    %v1351 = vpow.pop %v1350
    %v1352 = vmul.f32 %v1337, 1.442695
    %v1353 = vpow.pop %v1352
    %v1354 = vsel %vm164, %v1339, 0.0
    %v1355 = vsel %vm164, %v1347, 0.0
    %v1356 = vadd.f32 %v1354, %v1355
    %v1357 = vsel %vm164, %v1341, 0.0
    %v1358 = vsel %vm164, %v1349, 0.0
    %v1359 = vadd.f32 %v1357, %v1358
    %v1360 = vsel %vm164, %v1343, 0.0
    %v1361 = vsel %vm164, %v1351, 0.0
    %v1362 = vadd.f32 %v1360, %v1361
    %v1363 = vsel %vm164, %v1345, 0.0
    %v1364 = vsel %vm164, %v1353, 0.0
    %v1365 = vadd.f32 %v1363, %v1364
    %v1366 = vrcp.pop %v1356
    %v1367 = vrcp.pop %v1359
    %v1368 = vrcp.pop %v1362
    %v1369 = vrcp.pop %v1365
    %v1370 = vmul.f32 %v1339, %v1366
    %v1371 = vmul.f32 %v1341, %v1367
    %v1372 = vmul.f32 %v1343, %v1368
    %v1373 = vmul.f32 %v1345, %v1369
    %v1374 = vmul.f32 %v1347, %v1366
    %v1375 = vmul.f32 %v1349, %v1367
    %v1376 = vmul.f32 %v1351, %v1368
    %v1377 = vmul.f32 %v1353, %v1369
    %v1378 = vpack.c.bf16 %v1130, %v1130
    %v1379 = vpack.c.bf16 %v1131, %v1131
    %v1380 = vpack.c.bf16 %v1371, %v1370
    %v1381 = vpack.c.bf16 %v1373, %v1372
    %v1382 = vpack.c.bf16 %v1375, %v1374
    %v1383 = vpack.c.bf16 %v1377, %v1376
    %v1385 = vsel %vm164, %v1378, 0
    %v1388 = vsel %vm164, %v1380, 0
    %v1391 = vsel %vm164, %v1381, 0
    %1393 = vmatprep.subr.bf16.mxu0 0
    %1394 = vmatpush1.bf16.xpose.msra.mxu0 %v1388
    %1395 = vmatprep.subr.bf16.mxu0 0
    %1396 = vmatpush1.bf16.xpose.msra.mxu0 %v1391
    %1397 = vmatprep.subr.bf16.mxu0 0
    %1398 = vmatpush1.bf16.xpose.msra.mxu0 0
    %1399 = vmatprep.subr.bf16.mxu0 0
    %1400 = vmatpush1.bf16.xpose.msra.mxu0 0
    %1401 = vmatprep.subr.bf16.mxu0 0
    %1402 = vmatpush1.bf16.xpose.msra.mxu0 0
    %1403 = vmatprep.subr.bf16.mxu0 0
    %1404 = vmatpush1.bf16.xpose.msra.mxu0 0
    %1405 = vmatprep.subr.bf16.mxu0 0
    %1406 = vmatpush1.bf16.xpose.msra.mxu0 0
    %1407 = vmatprep.subr.bf16.mxu0 0
    %1408 = vmatpush1.bf16.xpose.msra.mxu0 0
    %1409 = vmatprep.subr.bf16.mxu0 0
    %1410 = vmatpush1.bf16.xpose.msra.mxu0 0
    %1411 = vmatprep.subr.bf16.mxu0 0
    %1412 = vmatpush1.bf16.xpose.msra.mxu0 0
    %1413 = vmatprep.subr.bf16.mxu0 0
    %1414 = vmatpush1.bf16.xpose.msra.mxu0 0
    %1415 = vmatprep.subr.bf16.mxu0 0
    %1416 = vmatpush1.bf16.xpose.msra.mxu0 0
    %1417 = vmatprep.subr.bf16.mxu0 0
    %1418 = vmatpush1.bf16.xpose.msra.mxu0 0
    %1419 = vmatprep.subr.bf16.mxu0 0
    %1420 = vmatpush1.bf16.xpose.msra.mxu0 0
    %1421 = vmatprep.subr.bf16.mxu0 0
    %1422 = vmatpush1.bf16.xpose.msra.mxu0 0
    %1423 = vmatprep.subr.bf16.mxu0 0
    %1424 = vmatpush1.bf16.xpose.msra.mxu0 0
    %1425 = vmatprep.mubr.bf16.mxu0 0
    %1426 = vmatmul.mubr.bf16.gmra.mrb[0].mxu0 %v1385
    %v1427 = vpop.f32.mrb[0].mxu0
    %v1428 = vadd.f32 0.0, %v1427
    %v1429 = vpop.f32.mrb[0].mxu0
    %v1430 = vpop.f32.mrb[0].mxu0
    %v1431 = vpop.f32.mrb[0].mxu0
    %1432 = vdwg.mxu0
    %v1434 = vsel %vm164, %v1379, 0
    %v1437 = vsel %vm164, %v1382, 0
    %v1440 = vsel %vm164, %v1383, 0
    %1442 = vmatprep.subr.bf16.mxu0 0
    %1443 = vmatpush1.bf16.xpose.msra.mxu0 %v1437
    %1444 = vmatprep.subr.bf16.mxu0 0
    %1445 = vmatpush1.bf16.xpose.msra.mxu0 %v1440
    %1446 = vmatprep.subr.bf16.mxu0 0
    %1447 = vmatpush1.bf16.xpose.msra.mxu0 0
    %1448 = vmatprep.subr.bf16.mxu0 0
    %1449 = vmatpush1.bf16.xpose.msra.mxu0 0
    %1450 = vmatprep.subr.bf16.mxu0 0
    %1451 = vmatpush1.bf16.xpose.msra.mxu0 0
    %1452 = vmatprep.subr.bf16.mxu0 0
    %1453 = vmatpush1.bf16.xpose.msra.mxu0 0
    %1454 = vmatprep.subr.bf16.mxu0 0
    %1455 = vmatpush1.bf16.xpose.msra.mxu0 0
    %1456 = vmatprep.subr.bf16.mxu0 0
    %1457 = vmatpush1.bf16.xpose.msra.mxu0 0
    %1458 = vmatprep.subr.bf16.mxu0 0
    %1459 = vmatpush1.bf16.xpose.msra.mxu0 0
    %1460 = vmatprep.subr.bf16.mxu0 0
    %1461 = vmatpush1.bf16.xpose.msra.mxu0 0
    %1462 = vmatprep.subr.bf16.mxu0 0
    %1463 = vmatpush1.bf16.xpose.msra.mxu0 0
    %1464 = vmatprep.subr.bf16.mxu0 0
    %1465 = vmatpush1.bf16.xpose.msra.mxu0 0
    %1466 = vmatprep.subr.bf16.mxu0 0
    %1467 = vmatpush1.bf16.xpose.msra.mxu0 0
    %1468 = vmatprep.subr.bf16.mxu0 0
    %1469 = vmatpush1.bf16.xpose.msra.mxu0 0
    %1470 = vmatprep.subr.bf16.mxu0 0
    %1471 = vmatpush1.bf16.xpose.msra.mxu0 0
    %1472 = vmatprep.subr.bf16.mxu0 0
    %1473 = vmatpush1.bf16.xpose.msra.mxu0 0
    %1474 = vmatprep.mubr.bf16.mxu0 0
    %1475 = vmatmul.mubr.bf16.gmra.mrb[0].mxu0 %v1434
    %v1476 = vpop.f32.mrb[0].mxu0
    %v1477 = vadd.f32 0.0, %v1476
    %v1478 = vpop.f32.mrb[0].mxu0
    %v1479 = vpop.f32.mrb[0].mxu0
    %v1480 = vpop.f32.mrb[0].mxu0
    %1481 = vdwg.mxu0
    %1482 = vxpose.xlu0.b32.start [1/16] %v1428, 128
    %1483 = vxpose.xlu0.b32.cont [2/16] 0.0, 128
    %1484 = vxpose.xlu0.b32.cont [3/16] 0.0, 128
    %1485 = vxpose.xlu0.b32.cont [4/16] 0.0, 128
    %1486 = vxpose.xlu0.b32.cont [5/16] 0.0, 128
    %1487 = vxpose.xlu0.b32.cont [6/16] 0.0, 128
    %1488 = vxpose.xlu0.b32.cont [7/16] 0.0, 128
    %1489 = vxpose.xlu0.b32.cont [8/16] 0.0, 128
    %1490 = vxpose.xlu0.b32.cont [9/16] 0.0, 128
    %1491 = vxpose.xlu0.b32.cont [10/16] 0.0, 128
    %1492 = vxpose.xlu0.b32.cont [11/16] 0.0, 128
    %1493 = vxpose.xlu0.b32.cont [12/16] 0.0, 128
    %1494 = vxpose.xlu0.b32.cont [13/16] 0.0, 128
    %1495 = vxpose.xlu0.b32.cont [14/16] 0.0, 128
    %1496 = vxpose.xlu0.b32.cont [15/16] 0.0, 128
    %1497 = vxpose.xlu0.b32.end [16/16] 0.0, 128
    %v1498 = vpop.trf.xlu0
    %v1499 = vpop.trf.xlu0
    %v1500 = vpop.trf.xlu0
    %v1501 = vpop.trf.xlu0
    %v1502 = vpop.trf.xlu0
    %v1503 = vpop.trf.xlu0
    %v1504 = vpop.trf.xlu0
    %v1505 = vpop.trf.xlu0
    %v1506 = vpop.trf.xlu0
    %v1507 = vpop.trf.xlu0
    %v1508 = vpop.trf.xlu0
    %v1509 = vpop.trf.xlu0
    %v1510 = vpop.trf.xlu0
    %v1511 = vpop.trf.xlu0
    %v1512 = vpop.trf.xlu0
    %v1513 = vpop.trf.xlu0
    %1514 = vxpose.xlu0.b32.start [1/16] %v1477, 128
    %1515 = vxpose.xlu0.b32.cont [2/16] 0.0, 128
    %1516 = vxpose.xlu0.b32.cont [3/16] 0.0, 128
    %1517 = vxpose.xlu0.b32.cont [4/16] 0.0, 128
    %1518 = vxpose.xlu0.b32.cont [5/16] 0.0, 128
    %1519 = vxpose.xlu0.b32.cont [6/16] 0.0, 128
    %1520 = vxpose.xlu0.b32.cont [7/16] 0.0, 128
    %1521 = vxpose.xlu0.b32.cont [8/16] 0.0, 128
    %1522 = vxpose.xlu0.b32.cont [9/16] 0.0, 128
    %1523 = vxpose.xlu0.b32.cont [10/16] 0.0, 128
    %1524 = vxpose.xlu0.b32.cont [11/16] 0.0, 128
    %1525 = vxpose.xlu0.b32.cont [12/16] 0.0, 128
    %1526 = vxpose.xlu0.b32.cont [13/16] 0.0, 128
    %1527 = vxpose.xlu0.b32.cont [14/16] 0.0, 128
    %1528 = vxpose.xlu0.b32.cont [15/16] 0.0, 128
    %1529 = vxpose.xlu0.b32.end [16/16] 0.0, 128
    %v1530 = vpop.trf.xlu0
    %v1531 = vpop.trf.xlu0
    %v1532 = vpop.trf.xlu0
    %v1533 = vpop.trf.xlu0
    %v1534 = vpop.trf.xlu0
    %v1535 = vpop.trf.xlu0
    %v1536 = vpop.trf.xlu0
    %v1537 = vpop.trf.xlu0
    %v1538 = vpop.trf.xlu0
    %v1539 = vpop.trf.xlu0
    %v1540 = vpop.trf.xlu0
    %v1541 = vpop.trf.xlu0
    %v1542 = vpop.trf.xlu0
    %v1543 = vpop.trf.xlu0
    %v1544 = vpop.trf.xlu0
    %v1545 = vpop.trf.xlu0
    %1546 = vst.msk [vmem:[%s19] sm:$0xff] %vm534, %v1498
    %1547 = vst.msk [vmem:[%s19 + $0x8] sm:$0xff] %vm534, %v1499
    %1548 = vst.msk [vmem:[%s19 + $0x10] sm:$0xff] %vm534, %v1500
    %1549 = vst.msk [vmem:[%s19 + $0x18] sm:$0xff] %vm534, %v1501
    %1550 = vst.msk [vmem:[%s19 + $0x20] sm:$0xff] %vm534, %v1530
    %1551 = vst.msk [vmem:[%s19 + $0x28] sm:$0xff] %vm534, %v1531
    %1552 = vst.msk [vmem:[%s19 + $0x30] sm:$0xff] %vm534, %v1532
    %1553 = vst.msk [vmem:[%s19 + $0x38] sm:$0xff] %vm534, %v1533
    // Predicated region
    $region82: #{tpu_custom_call.1} parent=1 // pred_check
      _
    $region83: #{tpu_custom_call.1} parent=1 // pred_check_branch
      %1555 = sbr.rel (0) target = $region85
    $region84: #{tpu_custom_call.1} parent=1 // pred_region
      _
    $region85: #{tpu_custom_call.1} parent=1 // pred_fallthru
      _
    // Predicated region
    $region86: #{tpu_custom_call.1} parent=1 // pred_check
      _
    $region87: #{tpu_custom_call.1} parent=1 // pred_check_branch
      %1557 = sbr.rel (0) target = $region89
    $region88: #{tpu_custom_call.1} parent=1 // pred_region
      _
    $region89: #{tpu_custom_call.1} parent=1 // pred_fallthru
      _
    %1558 = vsyncpa [#allocation3], 1

</llo_original>
